<compile_context>
chip_gen: v6e
topology: v6e:2x2x1
jax: 0.10.0
libtpu: 0.0.40
codegen_flags: <defaults>
</compile_context>

<pallas_src>
import functools

import jax
import jax.numpy as jnp
from jax.experimental import pallas as pl
from jax.experimental.pallas import tpu as pltpu

_EPS = 1e-5
_INV_SQRT2 = 0.7071067811865476


def _gelu(x):
    # exact (erf-based) GELU, matching torch.nn.GELU() default
    return 0.5 * x * (1.0 + jax.lax.erf(x * _INV_SQRT2))


def _layernorm(x, gamma, beta):
    mu = jnp.mean(x, axis=-1, keepdims=True)
    xc = x - mu
    var = jnp.mean(xc * xc, axis=-1, keepdims=True)
    return xc * jax.lax.rsqrt(var + _EPS) * gamma + beta


# ---------------------------------------------------------------------------
# Pallas kernels
# ---------------------------------------------------------------------------
def _node_update_kernel(hEV_ref, hV_ref, mA_ref, mV_ref,
                        W1v_ref, W1eg_ref, b1_ref, W2_ref, b2_ref,
                        W3_ref, b3_ref, g1_ref, be1_ref,
                        Win_ref, bin_ref, Wout_ref, bout_ref,
                        g2_ref, be2_ref, out_ref, *, K, scale, cdt):
    """One (batch, node-tile) step of the node update.

    hEV_ref : [1, K, TN, 2C]   (h_E, gathered h_V) neighbor-major
    hV_ref  : [1, TN, C]
    mA_ref  : [1, TN, K]       mask_attend, lane-dense
    mV_ref  : [1, TN, 1]       mask_V
    out_ref : [1, TN, C]
    """
    f32 = jnp.float32
    hv = hV_ref[0]                                     # [TN, C] f32
    mA = mA_ref[0]                                     # [TN, K]

    W1eg = W1eg_ref[...]
    W2 = W2_ref[...]
    W3 = W3_ref[...]
    b1 = b1_ref[...]
    b2 = b2_ref[...]
    b3 = b3_ref[...]

    # center-node contribution of W1 (h_V_expand never materialized)
    hv_part = jnp.dot(hv.astype(cdt), W1v_ref[...],
                      preferred_element_type=f32)      # [TN, C]

    acc = jnp.zeros(hv.shape, f32)
    for k in range(K):                                  # short unrolled loop
        x = hEV_ref[0, k].astype(cdt)                   # [TN, 2C] contiguous slab
        h = _gelu(jnp.dot(x, W1eg, preferred_element_type=f32) + hv_part + b1)
        h = _gelu(jnp.dot(h.astype(cdt), W2, preferred_element_type=f32) + b2)
        m = jnp.dot(h.astype(cdt), W3, preferred_element_type=f32) + b3
        acc = acc + m * mA[:, k:k + 1]                  # mask + K-sum fused
    dh = acc * (1.0 / scale)

    # residual + LayerNorm1 (dropout = identity, eval mode)
    hv1 = _layernorm(hv + dh, g1_ref[...], be1_ref[...])

    # PositionWiseFeedForward: W_out(gelu(W_in(h)))
    ff = _gelu(jnp.dot(hv1.astype(cdt), Win_ref[...],
                       preferred_element_type=f32) + bin_ref[...])
    ff = jnp.dot(ff.astype(cdt), Wout_ref[...],
                 preferred_element_type=f32) + bout_ref[...]

    # residual + LayerNorm2, then mask_V
    hv2 = _layernorm(hv1 + ff, g2_ref[...], be2_ref[...])
    out_ref[0] = hv2 * mV_ref[0]


def _edge_update_kernel(hEV_ref, hV_ref, hE_ref,
                        W11v_ref, W11eg_ref, b11_ref, W12_ref, b12_ref,
                        W13_ref, b13_ref, g3_ref, be3_ref, out_ref,
                        *, K, cdt):
    """One (batch, node-tile) step of the edge update.

    hEV_ref : [1, K, TN, 2C]   (h_E, gathered h_V_new)
    hV_ref  : [1, TN, C]       h_V_new (center nodes)
    hE_ref  : [1, K, TN, C]
    out_ref : [1, K, TN, C]
    """
    f32 = jnp.float32
    hv = hV_ref[0]                                     # [TN, C]

    W11eg = W11eg_ref[...]
    W12 = W12_ref[...]
    W13 = W13_ref[...]
    b11 = b11_ref[...]
    b12 = b12_ref[...]
    b13 = b13_ref[...]
    g3 = g3_ref[...]
    be3 = be3_ref[...]

    hv_part = jnp.dot(hv.astype(cdt), W11v_ref[...],
                      preferred_element_type=f32)      # [TN, C]

    for k in range(K):
        x = hEV_ref[0, k].astype(cdt)                   # [TN, 2C]
        h = _gelu(jnp.dot(x, W11eg, preferred_element_type=f32) + hv_part + b11)
        h = _gelu(jnp.dot(h.astype(cdt), W12, preferred_element_type=f32) + b12)
        m = jnp.dot(h.astype(cdt), W13, preferred_element_type=f32) + b13
        out_ref[0, k] = _layernorm(hE_ref[0, k] + m, g3, be3)


# ---------------------------------------------------------------------------
# JAX glue (gather / concat / transpose are data movement, fused by XLA)
# ---------------------------------------------------------------------------
def gather_nodes(nodes, neighbor_idx):
    # nodes: [B, N, C], neighbor_idx: [B, N, K] -> [B, N, K, C]
    B, N, K = neighbor_idx.shape
    C = nodes.shape[-1]
    flat = neighbor_idx.reshape(B, N * K)
    idx = jnp.broadcast_to(flat[:, :, None], (B, N * K, C))
    g = jnp.take_along_axis(nodes, idx, axis=1)
    return g.reshape(B, N, K, C)


def _build_hEV_t(h_nodes, h_E, E_idx):
    # [h_E, gathered(h_nodes)] concat, neighbor-major: [B, K, N, 2C]
    g = gather_nodes(h_nodes, E_idx)                   # [B, N, K, C]
    hEV = jnp.concatenate([h_E, g], axis=-1)           # [B, N, K, 2C]
    return jnp.transpose(hEV, (0, 2, 1, 3))            # [B, K, N, 2C]


def _choose_tiles(N, K, C):
    """Node-tile size TN and padded node count Np.

    Keeps the double-buffered activation tiles (hEV 2C + hE C + out C per
    grid step) well under the default scoped-VMEM limit, so the same sizing
    is safe on v7x (64 MiB VMEM) as well as v5e/v6e (128 MiB).
    """
    if N <= 128:
        return N, N
    tn = 128
    while tn > 8 and 2 * tn * K * (4 * C) * 4 > 24 * (1 << 20):
        tn //= 2
    n_tiles = pl.cdiv(N, tn)
    return tn, n_tiles * tn


def enc_layer_forward(params, h_V, h_E, E_idx, mask_V=None, mask_attend=None,
                      scale=30.0, compute_dtype=jnp.float32):
    B, N, C = h_V.shape
    K = E_idx.shape[-1]
    f32 = jnp.float32
    cdt = compute_dtype           # set to jnp.bfloat16 for 2x MXU throughput
    h_V = h_V.astype(f32)
    h_E = h_E.astype(f32)

    mA = jnp.ones((B, N, K), f32) if mask_attend is None else mask_attend.astype(f32)
    mV = jnp.ones((B, N), f32) if mask_V is None else mask_V.astype(f32)

    tn, Np = _choose_tiles(N, K, C)
    pad = Np - N
    if pad:
        h_V = jnp.pad(h_V, ((0, 0), (0, pad), (0, 0)))
        h_E = jnp.pad(h_E, ((0, 0), (0, pad), (0, 0), (0, 0)))
        E_idx = jnp.pad(E_idx, ((0, 0), (0, pad), (0, 0)))
        mA = jnp.pad(mA, ((0, 0), (0, pad), (0, 0)))
        mV = jnp.pad(mV, ((0, 0), (0, pad)))          # padded nodes masked to 0
    mV3 = mV[..., None]                                # [B, Np, 1]

    p = params
    # split W1 / W11 into center-node part and (edge, gathered) part
    W1v, W1eg = p['W1'][:C].astype(cdt), p['W1'][C:].astype(cdt)
    W11v, W11eg = p['W11'][:C].astype(cdt), p['W11'][C:].astype(cdt)
    W2, W3 = p['W2'].astype(cdt), p['W3'].astype(cdt)
    W12, W13 = p['W12'].astype(cdt), p['W13'].astype(cdt)
    Win, Wout = p['Win'].astype(cdt), p['Wout'].astype(cdt)

    grid = (B, Np // tn)

    hEV_spec = pl.BlockSpec((1, K, tn, 2 * C), lambda b, n: (b, 0, n, 0))
    hE_spec = pl.BlockSpec((1, K, tn, C), lambda b, n: (b, 0, n, 0))
    hv_spec = pl.BlockSpec((1, tn, C), lambda b, n: (b, n, 0))
    mA_spec = pl.BlockSpec((1, tn, K), lambda b, n: (b, n, 0))
    mV_spec = pl.BlockSpec((1, tn, 1), lambda b, n: (b, n, 0))

    def wspec(x):
        nd = x.ndim
        return pl.BlockSpec(x.shape, lambda b, n, _nd=nd: (0,) * _nd)

    cparams = pltpu.CompilerParams(dimension_semantics=("parallel", "parallel"))

    # ---------------- stage 1: node update ----------------
    hEV1_t = _build_hEV_t(h_V, h_E, E_idx)             # [B, K, Np, 2C]
    node_inputs = (hEV1_t, h_V, mA, mV3,
                   W1v, W1eg, p['b1'], W2, p['b2'], W3, p['b3'],
                   p['g1'], p['be1'],
                   Win, p['bin'], Wout, p['bout'],
                   p['g2'], p['be2'])
    node_specs = ([hEV_spec, hv_spec, mA_spec, mV_spec]
                  + [wspec(x) for x in node_inputs[4:]])

    h_V_new_p = pl.pallas_call(
        functools.partial(_node_update_kernel, K=K, scale=float(scale), cdt=cdt),
        out_shape=jax.ShapeDtypeStruct((B, Np, C), f32),
        grid=grid,
        in_specs=node_specs,
        out_specs=hv_spec,
        compiler_params=cparams,
    )(*node_inputs)

    # ---------------- stage 2: edge update ----------------
    hEV2_t = _build_hEV_t(h_V_new_p, h_E, E_idx)       # [B, K, Np, 2C]
    hE_t = jnp.transpose(h_E, (0, 2, 1, 3))            # [B, K, Np, C]
    edge_inputs = (hEV2_t, h_V_new_p, hE_t,
                   W11v, W11eg, p['b11'], W12, p['b12'], W13, p['b13'],
                   p['g3'], p['be3'])
    edge_specs = ([hEV_spec, hv_spec, hE_spec]
                  + [wspec(x) for x in edge_inputs[3:]])

    h_E_new_t = pl.pallas_call(
        functools.partial(_edge_update_kernel, K=K, cdt=cdt),
        out_shape=jax.ShapeDtypeStruct((B, K, Np, C), f32),
        grid=grid,
        in_specs=edge_specs,
        out_specs=hE_spec,
        compiler_params=cparams,
    )(*edge_inputs)

    h_V_new = h_V_new_p[:, :N]
    h_E_new = jnp.transpose(h_E_new_t, (0, 2, 1, 3))[:, :N]   # [B, N, K, C]
    return h_V_new, h_E_new


# ---------------------------------------------------------------------------
# Pure-JAX reference (mirrors the PyTorch forward), for a sanity check
# ---------------------------------------------------------------------------
def _reference_forward(p, h_V, h_E, E_idx, mask_V, mask_attend, scale):
    hg = gather_nodes(h_V, E_idx)
    hVx = jnp.broadcast_to(h_V[:, :, None, :], hg.shape)
    hEV = jnp.concatenate([hVx, h_E, hg], -1)
    h = _gelu(jnp.dot(hEV, p['W1']) + p['b1'])
    h = _gelu(jnp.dot(h, p['W2']) + p['b2'])
    m = jnp.dot(h, p['W3']) + p['b3']
    m = mask_attend[..., None] * m
    dh = jnp.sum(m, -2) / scale
    hV1 = _layernorm(h_V + dh, p['g1'], p['be1'])
    ff = jnp.dot(_gelu(jnp.dot(hV1, p['Win']) + p['bin']), p['Wout']) + p['bout']
    hV2 = _layernorm(hV1 + ff, p['g2'], p['be2'])
    hV2 = mask_V[..., None] * hV2
    hg2 = gather_nodes(hV2, E_idx)
    hVx2 = jnp.broadcast_to(hV2[:, :, None, :], hg2.shape)
    hEV2 = jnp.concatenate([hVx2, h_E, hg2], -1)
    h = _gelu(jnp.dot(hEV2, p['W11']) + p['b11'])
    h = _gelu(jnp.dot(h, p['W12']) + p['b12'])
    m = jnp.dot(h, p['W13']) + p['b13']
    hE2 = _layernorm(h_E + m, p['g3'], p['be3'])
    return hV2, hE2


# ---------------------------------------------------------------------------
# Deterministic parameter init (synthetic, no checkpoint)
# ---------------------------------------------------------------------------
def init_params(key, num_hidden):
    C = num_hidden
    d_in = 3 * C            # num_hidden + num_in, with num_in = 2*num_hidden
    d_ff = 4 * C
    shapes = [
        ('W1', (d_in, C)), ('b1', (1, C)),
        ('W2', (C, C)), ('b2', (1, C)),
        ('W3', (C, C)), ('b3', (1, C)),
        ('W11', (d_in, C)), ('b11', (1, C)),
        ('W12', (C, C)), ('b12', (1, C)),
        ('W13', (C, C)), ('b13', (1, C)),
        ('Win', (C, d_ff)), ('bin', (1, d_ff)),
        ('Wout', (d_ff, C)), ('bout', (1, C)),
    ]
    params = {}
    keys = jax.random.split(key, len(shapes))
    for (name, shape), k in zip(shapes, keys):
        fan_in = shape[0] if name.startswith('W') else shape[1]
        params[name] = (jax.random.normal(k, shape, jnp.float32)
                        / jnp.sqrt(jnp.float32(fan_in)))
    for g, b in [('g1', 'be1'), ('g2', 'be2'), ('g3', 'be3')]:
        params[g] = jnp.ones((1, C), jnp.float32)    # LayerNorm weight
        params[b] = jnp.zeros((1, C), jnp.float32)   # LayerNorm bias
    return params


if __name__ == "__main__":
    key = jax.random.PRNGKey(0)
    B, N, K, C = 2, 8, 4, 32          # num_hidden=32, num_in=64, scale=30
    k1, k2, k3, k4, k5, kp = jax.random.split(key, 6)
    h_V = jax.random.normal(k1, (B, N, C), jnp.float32)
    h_E = jax.random.normal(k2, (B, N, K, C), jnp.float32)
    E_idx = jax.random.randint(k3, (B, N, K), 0, N, dtype=jnp.int32)
    mask_V = (jax.random.uniform(k4, (B, N)) > 0.2).astype(jnp.float32)
    mask_attend = (jax.random.uniform(k5, (B, N, K)) > 0.2).astype(jnp.float32)

    params = init_params(kp, C)

    h_V_out, h_E_out = enc_layer_forward(params, h_V, h_E, E_idx,
                                         mask_V=mask_V, mask_attend=mask_attend,
                                         scale=30.0)
    jax.block_until_ready((h_V_out, h_E_out))
    assert h_V_out.shape == (B, N, C) and h_E_out.shape == (B, N, K, C)

    # sanity check vs plain-JAX reference of the PyTorch forward
    hV_ref, hE_ref = _reference_forward(params, h_V, h_E, E_idx,
                                        mask_V, mask_attend, 30.0)
    assert jnp.allclose(h_V_out, hV_ref, atol=2e-2, rtol=2e-2)
    assert jnp.allclose(h_E_out, hE_ref, atol=2e-2, rtol=2e-2)

    print("KERNEL_OK")
</pallas_src>

<mosaic_0001>
module attributes {stable_mosaic.version = 11 : i64} {
  func.func @_node_update_kernel(%arg0: i32, %arg1: i32, %arg2: memref<1x4x8x64xf32, #tpu.memory_space<vmem>>, %arg3: memref<1x8x32xf32, #tpu.memory_space<vmem>>, %arg4: memref<1x8x4xf32, #tpu.memory_space<vmem>>, %arg5: memref<1x8x1xf32, #tpu.memory_space<vmem>>, %arg6: memref<32x32xf32, #tpu.memory_space<vmem>>, %arg7: memref<64x32xf32, #tpu.memory_space<vmem>>, %arg8: memref<1x32xf32, #tpu.memory_space<vmem>>, %arg9: memref<32x32xf32, #tpu.memory_space<vmem>>, %arg10: memref<1x32xf32, #tpu.memory_space<vmem>>, %arg11: memref<32x32xf32, #tpu.memory_space<vmem>>, %arg12: memref<1x32xf32, #tpu.memory_space<vmem>>, %arg13: memref<1x32xf32, #tpu.memory_space<vmem>>, %arg14: memref<1x32xf32, #tpu.memory_space<vmem>>, %arg15: memref<32x128xf32, #tpu.memory_space<vmem>>, %arg16: memref<1x128xf32, #tpu.memory_space<vmem>>, %arg17: memref<128x32xf32, #tpu.memory_space<vmem>>, %arg18: memref<1x32xf32, #tpu.memory_space<vmem>>, %arg19: memref<1x32xf32, #tpu.memory_space<vmem>>, %arg20: memref<1x32xf32, #tpu.memory_space<vmem>>, %arg21: memref<1x8x32xf32, #tpu.memory_space<vmem>>) attributes {dimension_semantics = [#tpu.dimension_semantics<parallel>, #tpu.dimension_semantics<parallel>], iteration_bounds = array<i64: 2, 1>, scalar_prefetch = 0 : i64, scratch_operands = 0 : i64, tpu.core_type = #tpu.core_type<tc>, window_params = [{transform_indices = @transform_0, window_bounds = array<i64: 1, 4, 8, 64>}, {transform_indices = @transform_1, window_bounds = array<i64: 1, 8, 32>}, {transform_indices = @transform_2, window_bounds = array<i64: 1, 8, 4>}, {transform_indices = @transform_3, window_bounds = array<i64: 1, 8, 1>}, {pipeline_mode = #tpu.pipeline_mode<synchronous>, transform_indices = @transform_4, window_bounds = array<i64: 32, 32>}, {pipeline_mode = #tpu.pipeline_mode<synchronous>, transform_indices = @transform_5, window_bounds = array<i64: 64, 32>}, {pipeline_mode = #tpu.pipeline_mode<synchronous>, transform_indices = @transform_6, window_bounds = array<i64: 1, 32>}, {pipeline_mode = #tpu.pipeline_mode<synchronous>, transform_indices = @transform_7, window_bounds = array<i64: 32, 32>}, {pipeline_mode = #tpu.pipeline_mode<synchronous>, transform_indices = @transform_8, window_bounds = array<i64: 1, 32>}, {pipeline_mode = #tpu.pipeline_mode<synchronous>, transform_indices = @transform_9, window_bounds = array<i64: 32, 32>}, {pipeline_mode = #tpu.pipeline_mode<synchronous>, transform_indices = @transform_10, window_bounds = array<i64: 1, 32>}, {pipeline_mode = #tpu.pipeline_mode<synchronous>, transform_indices = @transform_11, window_bounds = array<i64: 1, 32>}, {pipeline_mode = #tpu.pipeline_mode<synchronous>, transform_indices = @transform_12, window_bounds = array<i64: 1, 32>}, {pipeline_mode = #tpu.pipeline_mode<synchronous>, transform_indices = @transform_13, window_bounds = array<i64: 32, 128>}, {pipeline_mode = #tpu.pipeline_mode<synchronous>, transform_indices = @transform_14, window_bounds = array<i64: 1, 128>}, {pipeline_mode = #tpu.pipeline_mode<synchronous>, transform_indices = @transform_15, window_bounds = array<i64: 128, 32>}, {pipeline_mode = #tpu.pipeline_mode<synchronous>, transform_indices = @transform_16, window_bounds = array<i64: 1, 32>}, {pipeline_mode = #tpu.pipeline_mode<synchronous>, transform_indices = @transform_17, window_bounds = array<i64: 1, 32>}, {pipeline_mode = #tpu.pipeline_mode<synchronous>, transform_indices = @transform_18, window_bounds = array<i64: 1, 32>}, {transform_indices = @transform_19, window_bounds = array<i64: 1, 8, 32>}]} {
    %c0 = arith.constant 0 : index
    %c0_0 = arith.constant 0 : index
    %c0_1 = arith.constant 0 : index
    %0 = vector.load %arg3[%c0, %c0_0, %c0_1] : memref<1x8x32xf32, #tpu.memory_space<vmem>>, vector<1x8x32xf32>
    %1 = vector.shape_cast %0 : vector<1x8x32xf32> to vector<8x32xf32>
    %c0_2 = arith.constant 0 : index
    %c0_3 = arith.constant 0 : index
    %c0_4 = arith.constant 0 : index
    %2 = vector.load %arg4[%c0_2, %c0_3, %c0_4] : memref<1x8x4xf32, #tpu.memory_space<vmem>>, vector<1x8x4xf32>
    %3 = vector.shape_cast %2 : vector<1x8x4xf32> to vector<8x4xf32>
    %c0_5 = arith.constant 0 : index
    %c0_6 = arith.constant 0 : index
    %4 = vector.load %arg7[%c0_5, %c0_6] : memref<64x32xf32, #tpu.memory_space<vmem>>, vector<64x32xf32>
    %c0_7 = arith.constant 0 : index
    %c0_8 = arith.constant 0 : index
    %5 = vector.load %arg9[%c0_7, %c0_8] : memref<32x32xf32, #tpu.memory_space<vmem>>, vector<32x32xf32>
    %c0_9 = arith.constant 0 : index
    %c0_10 = arith.constant 0 : index
    %6 = vector.load %arg11[%c0_9, %c0_10] : memref<32x32xf32, #tpu.memory_space<vmem>>, vector<32x32xf32>
    %c0_11 = arith.constant 0 : index
    %c0_12 = arith.constant 0 : index
    %7 = vector.load %arg8[%c0_11, %c0_12] : memref<1x32xf32, #tpu.memory_space<vmem>>, vector<1x32xf32>
    %c0_13 = arith.constant 0 : index
    %c0_14 = arith.constant 0 : index
    %8 = vector.load %arg10[%c0_13, %c0_14] : memref<1x32xf32, #tpu.memory_space<vmem>>, vector<1x32xf32>
    %c0_15 = arith.constant 0 : index
    %c0_16 = arith.constant 0 : index
    %9 = vector.load %arg12[%c0_15, %c0_16] : memref<1x32xf32, #tpu.memory_space<vmem>>, vector<1x32xf32>
    %c0_17 = arith.constant 0 : index
    %c0_18 = arith.constant 0 : index
    %10 = vector.load %arg6[%c0_17, %c0_18] : memref<32x32xf32, #tpu.memory_space<vmem>>, vector<32x32xf32>
    %cst = arith.constant dense<0.000000e+00> : vector<8x32xf32>
    %11 = tpu.matmul %1, %10, %cst {dimension_numbers = #tpu.dot_dimension_numbers<[1], [0], [0], [1], [0, 0, 1, 1], [], []>} : vector<8x32xf32>, vector<32x32xf32>, vector<8x32xf32> -> vector<8x32xf32>
    %cst_19 = arith.constant 0.000000e+00 : f32
    %12 = vector.broadcast %cst_19 : f32 to vector<8x32xf32>
    %c0_20 = arith.constant 0 : index
    %c0_21 = arith.constant 0 : index
    %c0_22 = arith.constant 0 : index
    %c0_23 = arith.constant 0 : index
    %13 = vector.load %arg2[%c0_20, %c0_21, %c0_22, %c0_23] : memref<1x4x8x64xf32, #tpu.memory_space<vmem>>, vector<1x1x8x64xf32>
    %14 = vector.shape_cast %13 : vector<1x1x8x64xf32> to vector<8x64xf32>
    %cst_24 = arith.constant dense<0.000000e+00> : vector<8x32xf32>
    %15 = tpu.matmul %14, %4, %cst_24 {dimension_numbers = #tpu.dot_dimension_numbers<[1], [0], [0], [1], [0, 0, 1, 1], [], []>} : vector<8x64xf32>, vector<64x32xf32>, vector<8x32xf32> -> vector<8x32xf32>
    %16 = arith.addf %15, %11 : vector<8x32xf32>
    %17 = vector.broadcast %7 : vector<1x32xf32> to vector<8x32xf32>
    %18 = arith.addf %16, %17 : vector<8x32xf32>
    %cst_25 = arith.constant 5.000000e-01 : f32
    %19 = vector.broadcast %cst_25 : f32 to vector<8x32xf32>
    %20 = arith.mulf %19, %18 : vector<8x32xf32>
    %cst_26 = arith.constant 0.707106769 : f32
    %21 = vector.broadcast %cst_26 : f32 to vector<8x32xf32>
    %22 = arith.mulf %18, %21 : vector<8x32xf32>
    %23 = math.erf %22 : vector<8x32xf32>
    %cst_27 = arith.constant 1.000000e+00 : f32
    %24 = vector.broadcast %cst_27 : f32 to vector<8x32xf32>
    %25 = arith.addf %24, %23 : vector<8x32xf32>
    %26 = arith.mulf %20, %25 : vector<8x32xf32>
    %cst_28 = arith.constant dense<0.000000e+00> : vector<8x32xf32>
    %27 = tpu.matmul %26, %5, %cst_28 {dimension_numbers = #tpu.dot_dimension_numbers<[1], [0], [0], [1], [0, 0, 1, 1], [], []>} : vector<8x32xf32>, vector<32x32xf32>, vector<8x32xf32> -> vector<8x32xf32>
    %28 = vector.broadcast %8 : vector<1x32xf32> to vector<8x32xf32>
    %29 = arith.addf %27, %28 : vector<8x32xf32>
    %cst_29 = arith.constant 5.000000e-01 : f32
    %30 = vector.broadcast %cst_29 : f32 to vector<8x32xf32>
    %31 = arith.mulf %30, %29 : vector<8x32xf32>
    %cst_30 = arith.constant 0.707106769 : f32
    %32 = vector.broadcast %cst_30 : f32 to vector<8x32xf32>
    %33 = arith.mulf %29, %32 : vector<8x32xf32>
    %34 = math.erf %33 : vector<8x32xf32>
    %cst_31 = arith.constant 1.000000e+00 : f32
    %35 = vector.broadcast %cst_31 : f32 to vector<8x32xf32>
    %36 = arith.addf %35, %34 : vector<8x32xf32>
    %37 = arith.mulf %31, %36 : vector<8x32xf32>
    %cst_32 = arith.constant dense<0.000000e+00> : vector<8x32xf32>
    %38 = tpu.matmul %37, %6, %cst_32 {dimension_numbers = #tpu.dot_dimension_numbers<[1], [0], [0], [1], [0, 0, 1, 1], [], []>} : vector<8x32xf32>, vector<32x32xf32>, vector<8x32xf32> -> vector<8x32xf32>
    %39 = vector.broadcast %9 : vector<1x32xf32> to vector<8x32xf32>
    %40 = arith.addf %38, %39 : vector<8x32xf32>
    %41 = vector.extract_strided_slice %3 {offsets = [0, 0], sizes = [8, 1], strides = [1, 1]} : vector<8x4xf32> to vector<8x1xf32>
    %42 = vector.broadcast %41 : vector<8x1xf32> to vector<8x32xf32>
    %43 = arith.mulf %40, %42 : vector<8x32xf32>
    %44 = arith.addf %12, %43 : vector<8x32xf32>
    %c0_33 = arith.constant 0 : index
    %c1 = arith.constant 1 : index
    %c0_34 = arith.constant 0 : index
    %c0_35 = arith.constant 0 : index
    %45 = vector.load %arg2[%c0_33, %c1, %c0_34, %c0_35] : memref<1x4x8x64xf32, #tpu.memory_space<vmem>>, vector<1x1x8x64xf32>
    %46 = vector.shape_cast %45 : vector<1x1x8x64xf32> to vector<8x64xf32>
    %cst_36 = arith.constant dense<0.000000e+00> : vector<8x32xf32>
    %47 = tpu.matmul %46, %4, %cst_36 {dimension_numbers = #tpu.dot_dimension_numbers<[1], [0], [0], [1], [0, 0, 1, 1], [], []>} : vector<8x64xf32>, vector<64x32xf32>, vector<8x32xf32> -> vector<8x32xf32>
    %48 = arith.addf %47, %11 : vector<8x32xf32>
    %49 = vector.broadcast %7 : vector<1x32xf32> to vector<8x32xf32>
    %50 = arith.addf %48, %49 : vector<8x32xf32>
    %cst_37 = arith.constant 5.000000e-01 : f32
    %51 = vector.broadcast %cst_37 : f32 to vector<8x32xf32>
    %52 = arith.mulf %51, %50 : vector<8x32xf32>
    %cst_38 = arith.constant 0.707106769 : f32
    %53 = vector.broadcast %cst_38 : f32 to vector<8x32xf32>
    %54 = arith.mulf %50, %53 : vector<8x32xf32>
    %55 = math.erf %54 : vector<8x32xf32>
    %cst_39 = arith.constant 1.000000e+00 : f32
    %56 = vector.broadcast %cst_39 : f32 to vector<8x32xf32>
    %57 = arith.addf %56, %55 : vector<8x32xf32>
    %58 = arith.mulf %52, %57 : vector<8x32xf32>
    %cst_40 = arith.constant dense<0.000000e+00> : vector<8x32xf32>
    %59 = tpu.matmul %58, %5, %cst_40 {dimension_numbers = #tpu.dot_dimension_numbers<[1], [0], [0], [1], [0, 0, 1, 1], [], []>} : vector<8x32xf32>, vector<32x32xf32>, vector<8x32xf32> -> vector<8x32xf32>
    %60 = vector.broadcast %8 : vector<1x32xf32> to vector<8x32xf32>
    %61 = arith.addf %59, %60 : vector<8x32xf32>
    %cst_41 = arith.constant 5.000000e-01 : f32
    %62 = vector.broadcast %cst_41 : f32 to vector<8x32xf32>
    %63 = arith.mulf %62, %61 : vector<8x32xf32>
    %cst_42 = arith.constant 0.707106769 : f32
    %64 = vector.broadcast %cst_42 : f32 to vector<8x32xf32>
    %65 = arith.mulf %61, %64 : vector<8x32xf32>
    %66 = math.erf %65 : vector<8x32xf32>
    %cst_43 = arith.constant 1.000000e+00 : f32
    %67 = vector.broadcast %cst_43 : f32 to vector<8x32xf32>
    %68 = arith.addf %67, %66 : vector<8x32xf32>
    %69 = arith.mulf %63, %68 : vector<8x32xf32>
    %cst_44 = arith.constant dense<0.000000e+00> : vector<8x32xf32>
    %70 = tpu.matmul %69, %6, %cst_44 {dimension_numbers = #tpu.dot_dimension_numbers<[1], [0], [0], [1], [0, 0, 1, 1], [], []>} : vector<8x32xf32>, vector<32x32xf32>, vector<8x32xf32> -> vector<8x32xf32>
    %71 = vector.broadcast %9 : vector<1x32xf32> to vector<8x32xf32>
    %72 = arith.addf %70, %71 : vector<8x32xf32>
    %73 = vector.extract_strided_slice %3 {offsets = [0, 1], sizes = [8, 1], strides = [1, 1]} : vector<8x4xf32> to vector<8x1xf32>
    %74 = vector.broadcast %73 : vector<8x1xf32> to vector<8x32xf32>
    %75 = arith.mulf %72, %74 : vector<8x32xf32>
    %76 = arith.addf %44, %75 : vector<8x32xf32>
    %c0_45 = arith.constant 0 : index
    %c2 = arith.constant 2 : index
    %c0_46 = arith.constant 0 : index
    %c0_47 = arith.constant 0 : index
    %77 = vector.load %arg2[%c0_45, %c2, %c0_46, %c0_47] : memref<1x4x8x64xf32, #tpu.memory_space<vmem>>, vector<1x1x8x64xf32>
    %78 = vector.shape_cast %77 : vector<1x1x8x64xf32> to vector<8x64xf32>
    %cst_48 = arith.constant dense<0.000000e+00> : vector<8x32xf32>
    %79 = tpu.matmul %78, %4, %cst_48 {dimension_numbers = #tpu.dot_dimension_numbers<[1], [0], [0], [1], [0, 0, 1, 1], [], []>} : vector<8x64xf32>, vector<64x32xf32>, vector<8x32xf32> -> vector<8x32xf32>
    %80 = arith.addf %79, %11 : vector<8x32xf32>
    %81 = vector.broadcast %7 : vector<1x32xf32> to vector<8x32xf32>
    %82 = arith.addf %80, %81 : vector<8x32xf32>
    %cst_49 = arith.constant 5.000000e-01 : f32
    %83 = vector.broadcast %cst_49 : f32 to vector<8x32xf32>
    %84 = arith.mulf %83, %82 : vector<8x32xf32>
    %cst_50 = arith.constant 0.707106769 : f32
    %85 = vector.broadcast %cst_50 : f32 to vector<8x32xf32>
    %86 = arith.mulf %82, %85 : vector<8x32xf32>
    %87 = math.erf %86 : vector<8x32xf32>
    %cst_51 = arith.constant 1.000000e+00 : f32
    %88 = vector.broadcast %cst_51 : f32 to vector<8x32xf32>
    %89 = arith.addf %88, %87 : vector<8x32xf32>
    %90 = arith.mulf %84, %89 : vector<8x32xf32>
    %cst_52 = arith.constant dense<0.000000e+00> : vector<8x32xf32>
    %91 = tpu.matmul %90, %5, %cst_52 {dimension_numbers = #tpu.dot_dimension_numbers<[1], [0], [0], [1], [0, 0, 1, 1], [], []>} : vector<8x32xf32>, vector<32x32xf32>, vector<8x32xf32> -> vector<8x32xf32>
    %92 = vector.broadcast %8 : vector<1x32xf32> to vector<8x32xf32>
    %93 = arith.addf %91, %92 : vector<8x32xf32>
    %cst_53 = arith.constant 5.000000e-01 : f32
    %94 = vector.broadcast %cst_53 : f32 to vector<8x32xf32>
    %95 = arith.mulf %94, %93 : vector<8x32xf32>
    %cst_54 = arith.constant 0.707106769 : f32
    %96 = vector.broadcast %cst_54 : f32 to vector<8x32xf32>
    %97 = arith.mulf %93, %96 : vector<8x32xf32>
    %98 = math.erf %97 : vector<8x32xf32>
    %cst_55 = arith.constant 1.000000e+00 : f32
    %99 = vector.broadcast %cst_55 : f32 to vector<8x32xf32>
    %100 = arith.addf %99, %98 : vector<8x32xf32>
    %101 = arith.mulf %95, %100 : vector<8x32xf32>
    %cst_56 = arith.constant dense<0.000000e+00> : vector<8x32xf32>
    %102 = tpu.matmul %101, %6, %cst_56 {dimension_numbers = #tpu.dot_dimension_numbers<[1], [0], [0], [1], [0, 0, 1, 1], [], []>} : vector<8x32xf32>, vector<32x32xf32>, vector<8x32xf32> -> vector<8x32xf32>
    %103 = vector.broadcast %9 : vector<1x32xf32> to vector<8x32xf32>
    %104 = arith.addf %102, %103 : vector<8x32xf32>
    %105 = vector.extract_strided_slice %3 {offsets = [0, 2], sizes = [8, 1], strides = [1, 1]} : vector<8x4xf32> to vector<8x1xf32>
    %106 = vector.broadcast %105 : vector<8x1xf32> to vector<8x32xf32>
    %107 = arith.mulf %104, %106 : vector<8x32xf32>
    %108 = arith.addf %76, %107 : vector<8x32xf32>
    %c0_57 = arith.constant 0 : index
    %c3 = arith.constant 3 : index
    %c0_58 = arith.constant 0 : index
    %c0_59 = arith.constant 0 : index
    %109 = vector.load %arg2[%c0_57, %c3, %c0_58, %c0_59] : memref<1x4x8x64xf32, #tpu.memory_space<vmem>>, vector<1x1x8x64xf32>
    %110 = vector.shape_cast %109 : vector<1x1x8x64xf32> to vector<8x64xf32>
    %cst_60 = arith.constant dense<0.000000e+00> : vector<8x32xf32>
    %111 = tpu.matmul %110, %4, %cst_60 {dimension_numbers = #tpu.dot_dimension_numbers<[1], [0], [0], [1], [0, 0, 1, 1], [], []>} : vector<8x64xf32>, vector<64x32xf32>, vector<8x32xf32> -> vector<8x32xf32>
    %112 = arith.addf %111, %11 : vector<8x32xf32>
    %113 = vector.broadcast %7 : vector<1x32xf32> to vector<8x32xf32>
    %114 = arith.addf %112, %113 : vector<8x32xf32>
    %cst_61 = arith.constant 5.000000e-01 : f32
    %115 = vector.broadcast %cst_61 : f32 to vector<8x32xf32>
    %116 = arith.mulf %115, %114 : vector<8x32xf32>
    %cst_62 = arith.constant 0.707106769 : f32
    %117 = vector.broadcast %cst_62 : f32 to vector<8x32xf32>
    %118 = arith.mulf %114, %117 : vector<8x32xf32>
    %119 = math.erf %118 : vector<8x32xf32>
    %cst_63 = arith.constant 1.000000e+00 : f32
    %120 = vector.broadcast %cst_63 : f32 to vector<8x32xf32>
    %121 = arith.addf %120, %119 : vector<8x32xf32>
    %122 = arith.mulf %116, %121 : vector<8x32xf32>
    %cst_64 = arith.constant dense<0.000000e+00> : vector<8x32xf32>
    %123 = tpu.matmul %122, %5, %cst_64 {dimension_numbers = #tpu.dot_dimension_numbers<[1], [0], [0], [1], [0, 0, 1, 1], [], []>} : vector<8x32xf32>, vector<32x32xf32>, vector<8x32xf32> -> vector<8x32xf32>
    %124 = vector.broadcast %8 : vector<1x32xf32> to vector<8x32xf32>
    %125 = arith.addf %123, %124 : vector<8x32xf32>
    %cst_65 = arith.constant 5.000000e-01 : f32
    %126 = vector.broadcast %cst_65 : f32 to vector<8x32xf32>
    %127 = arith.mulf %126, %125 : vector<8x32xf32>
    %cst_66 = arith.constant 0.707106769 : f32
    %128 = vector.broadcast %cst_66 : f32 to vector<8x32xf32>
    %129 = arith.mulf %125, %128 : vector<8x32xf32>
    %130 = math.erf %129 : vector<8x32xf32>
    %cst_67 = arith.constant 1.000000e+00 : f32
    %131 = vector.broadcast %cst_67 : f32 to vector<8x32xf32>
    %132 = arith.addf %131, %130 : vector<8x32xf32>
    %133 = arith.mulf %127, %132 : vector<8x32xf32>
    %cst_68 = arith.constant dense<0.000000e+00> : vector<8x32xf32>
    %134 = tpu.matmul %133, %6, %cst_68 {dimension_numbers = #tpu.dot_dimension_numbers<[1], [0], [0], [1], [0, 0, 1, 1], [], []>} : vector<8x32xf32>, vector<32x32xf32>, vector<8x32xf32> -> vector<8x32xf32>
    %135 = vector.broadcast %9 : vector<1x32xf32> to vector<8x32xf32>
    %136 = arith.addf %134, %135 : vector<8x32xf32>
    %137 = vector.extract_strided_slice %3 {offsets = [0, 3], sizes = [8, 1], strides = [1, 1]} : vector<8x4xf32> to vector<8x1xf32>
    %138 = vector.broadcast %137 : vector<8x1xf32> to vector<8x32xf32>
    %139 = arith.mulf %136, %138 : vector<8x32xf32>
    %140 = arith.addf %108, %139 : vector<8x32xf32>
    %cst_69 = arith.constant 0.0333333351 : f32
    %141 = vector.broadcast %cst_69 : f32 to vector<8x32xf32>
    %142 = arith.mulf %140, %141 : vector<8x32xf32>
    %143 = arith.addf %1, %142 : vector<8x32xf32>
    %c0_70 = arith.constant 0 : index
    %c0_71 = arith.constant 0 : index
    %144 = vector.load %arg13[%c0_70, %c0_71] : memref<1x32xf32, #tpu.memory_space<vmem>>, vector<1x32xf32>
    %c0_72 = arith.constant 0 : index
    %c0_73 = arith.constant 0 : index
    %145 = vector.load %arg14[%c0_72, %c0_73] : memref<1x32xf32, #tpu.memory_space<vmem>>, vector<1x32xf32>
    %cst_74 = arith.constant dense<0.000000e+00> : vector<8xf32>
    %146 = vector.multi_reduction <add>, %143, %cst_74 [1] : vector<8x32xf32> to vector<8xf32>
    %147 = vector.shape_cast %146 : vector<8xf32> to vector<8x1xf32>
    %cst_75 = arith.constant 3.200000e+01 : f32
    %148 = vector.broadcast %cst_75 : f32 to vector<8x1xf32>
    %149 = arith.divf %147, %148 : vector<8x1xf32>
    %150 = vector.broadcast %149 : vector<8x1xf32> to vector<8x32xf32>
    %151 = arith.subf %143, %150 : vector<8x32xf32>
    %152 = arith.mulf %151, %151 : vector<8x32xf32>
    %cst_76 = arith.constant dense<0.000000e+00> : vector<8xf32>
    %153 = vector.multi_reduction <add>, %152, %cst_76 [1] : vector<8x32xf32> to vector<8xf32>
    %154 = vector.shape_cast %153 : vector<8xf32> to vector<8x1xf32>
    %cst_77 = arith.constant 3.200000e+01 : f32
    %155 = vector.broadcast %cst_77 : f32 to vector<8x1xf32>
    %156 = arith.divf %154, %155 : vector<8x1xf32>
    %cst_78 = arith.constant 9.99999974E-6 : f32
    %157 = vector.broadcast %cst_78 : f32 to vector<8x1xf32>
    %158 = arith.addf %156, %157 : vector<8x1xf32>
    %159 = math.rsqrt %158 : vector<8x1xf32>
    %160 = vector.broadcast %159 : vector<8x1xf32> to vector<8x32xf32>
    %161 = arith.mulf %151, %160 : vector<8x32xf32>
    %162 = vector.broadcast %144 : vector<1x32xf32> to vector<8x32xf32>
    %163 = arith.mulf %161, %162 : vector<8x32xf32>
    %164 = vector.broadcast %145 : vector<1x32xf32> to vector<8x32xf32>
    %165 = arith.addf %163, %164 : vector<8x32xf32>
    %c0_79 = arith.constant 0 : index
    %c0_80 = arith.constant 0 : index
    %166 = vector.load %arg15[%c0_79, %c0_80] : memref<32x128xf32, #tpu.memory_space<vmem>>, vector<32x128xf32>
    %cst_81 = arith.constant dense<0.000000e+00> : vector<8x128xf32>
    %167 = tpu.matmul %165, %166, %cst_81 {dimension_numbers = #tpu.dot_dimension_numbers<[1], [0], [0], [1], [0, 0, 1, 1], [], []>} : vector<8x32xf32>, vector<32x128xf32>, vector<8x128xf32> -> vector<8x128xf32>
    %c0_82 = arith.constant 0 : index
    %c0_83 = arith.constant 0 : index
    %168 = vector.load %arg16[%c0_82, %c0_83] : memref<1x128xf32, #tpu.memory_space<vmem>>, vector<1x128xf32>
    %169 = vector.broadcast %168 : vector<1x128xf32> to vector<8x128xf32>
    %170 = arith.addf %167, %169 : vector<8x128xf32>
    %cst_84 = arith.constant 5.000000e-01 : f32
    %171 = vector.broadcast %cst_84 : f32 to vector<8x128xf32>
    %172 = arith.mulf %171, %170 : vector<8x128xf32>
    %cst_85 = arith.constant 0.707106769 : f32
    %173 = vector.broadcast %cst_85 : f32 to vector<8x128xf32>
    %174 = arith.mulf %170, %173 : vector<8x128xf32>
    %175 = math.erf %174 : vector<8x128xf32>
    %cst_86 = arith.constant 1.000000e+00 : f32
    %176 = vector.broadcast %cst_86 : f32 to vector<8x128xf32>
    %177 = arith.addf %176, %175 : vector<8x128xf32>
    %178 = arith.mulf %172, %177 : vector<8x128xf32>
    %c0_87 = arith.constant 0 : index
    %c0_88 = arith.constant 0 : index
    %179 = vector.load %arg17[%c0_87, %c0_88] : memref<128x32xf32, #tpu.memory_space<vmem>>, vector<128x32xf32>
    %cst_89 = arith.constant dense<0.000000e+00> : vector<8x32xf32>
    %180 = tpu.matmul %178, %179, %cst_89 {dimension_numbers = #tpu.dot_dimension_numbers<[1], [0], [0], [1], [0, 0, 1, 1], [], []>} : vector<8x128xf32>, vector<128x32xf32>, vector<8x32xf32> -> vector<8x32xf32>
    %c0_90 = arith.constant 0 : index
    %c0_91 = arith.constant 0 : index
    %181 = vector.load %arg18[%c0_90, %c0_91] : memref<1x32xf32, #tpu.memory_space<vmem>>, vector<1x32xf32>
    %182 = vector.broadcast %181 : vector<1x32xf32> to vector<8x32xf32>
    %183 = arith.addf %180, %182 : vector<8x32xf32>
    %184 = arith.addf %165, %183 : vector<8x32xf32>
    %c0_92 = arith.constant 0 : index
    %c0_93 = arith.constant 0 : index
    %185 = vector.load %arg19[%c0_92, %c0_93] : memref<1x32xf32, #tpu.memory_space<vmem>>, vector<1x32xf32>
    %c0_94 = arith.constant 0 : index
    %c0_95 = arith.constant 0 : index
    %186 = vector.load %arg20[%c0_94, %c0_95] : memref<1x32xf32, #tpu.memory_space<vmem>>, vector<1x32xf32>
    %cst_96 = arith.constant dense<0.000000e+00> : vector<8xf32>
    %187 = vector.multi_reduction <add>, %184, %cst_96 [1] : vector<8x32xf32> to vector<8xf32>
    %188 = vector.shape_cast %187 : vector<8xf32> to vector<8x1xf32>
    %cst_97 = arith.constant 3.200000e+01 : f32
    %189 = vector.broadcast %cst_97 : f32 to vector<8x1xf32>
    %190 = arith.divf %188, %189 : vector<8x1xf32>
    %191 = vector.broadcast %190 : vector<8x1xf32> to vector<8x32xf32>
    %192 = arith.subf %184, %191 : vector<8x32xf32>
    %193 = arith.mulf %192, %192 : vector<8x32xf32>
    %cst_98 = arith.constant dense<0.000000e+00> : vector<8xf32>
    %194 = vector.multi_reduction <add>, %193, %cst_98 [1] : vector<8x32xf32> to vector<8xf32>
    %195 = vector.shape_cast %194 : vector<8xf32> to vector<8x1xf32>
    %cst_99 = arith.constant 3.200000e+01 : f32
    %196 = vector.broadcast %cst_99 : f32 to vector<8x1xf32>
    %197 = arith.divf %195, %196 : vector<8x1xf32>
    %cst_100 = arith.constant 9.99999974E-6 : f32
    %198 = vector.broadcast %cst_100 : f32 to vector<8x1xf32>
    %199 = arith.addf %197, %198 : vector<8x1xf32>
    %200 = math.rsqrt %199 : vector<8x1xf32>
    %201 = vector.broadcast %200 : vector<8x1xf32> to vector<8x32xf32>
    %202 = arith.mulf %192, %201 : vector<8x32xf32>
    %203 = vector.broadcast %185 : vector<1x32xf32> to vector<8x32xf32>
    %204 = arith.mulf %202, %203 : vector<8x32xf32>
    %205 = vector.broadcast %186 : vector<1x32xf32> to vector<8x32xf32>
    %206 = arith.addf %204, %205 : vector<8x32xf32>
    %c0_101 = arith.constant 0 : index
    %c0_102 = arith.constant 0 : index
    %c0_103 = arith.constant 0 : index
    %207 = vector.load %arg5[%c0_101, %c0_102, %c0_103] : memref<1x8x1xf32, #tpu.memory_space<vmem>>, vector<1x8x1xf32>
    %208 = vector.shape_cast %207 : vector<1x8x1xf32> to vector<8x1xf32>
    %209 = vector.broadcast %208 : vector<8x1xf32> to vector<8x32xf32>
    %210 = arith.mulf %206, %209 : vector<8x32xf32>
    %c0_104 = arith.constant 0 : index
    %c0_105 = arith.constant 0 : index
    %c0_106 = arith.constant 0 : index
    %211 = vector.load %arg21[%c0_104, %c0_105, %c0_106] : memref<1x8x32xf32, #tpu.memory_space<vmem>>, vector<1x8x32xf32>
    %212 = vector.shape_cast %211 : vector<1x8x32xf32> to vector<8x32xf32>
    %213 = vector.shape_cast %210 : vector<8x32xf32> to vector<1x8x32xf32>
    tpu.vector_store %arg21[%c0_104, %c0_105, %c0_106], %213 {strides = array<i32>} : memref<1x8x32xf32, #tpu.memory_space<vmem>>, vector<1x8x32xf32>,
    return
  }
  func.func @transform_0(%arg0: i32, %arg1: i32) -> (i32, i32, i32, i32) {
    %c0_i32 = arith.constant 0 : i32
    %c0_i32_0 = arith.constant 0 : i32
    %c0_i32_1 = arith.constant 0 : i32
    return %arg0, %c0_i32, %arg1, %c0_i32_0 : i32, i32, i32, i32
  }
  func.func @transform_1(%arg0: i32, %arg1: i32) -> (i32, i32, i32) {
    %c0_i32 = arith.constant 0 : i32
    %c0_i32_0 = arith.constant 0 : i32
    return %arg0, %arg1, %c0_i32 : i32, i32, i32
  }
  func.func @transform_2(%arg0: i32, %arg1: i32) -> (i32, i32, i32) {
    %c0_i32 = arith.constant 0 : i32
    %c0_i32_0 = arith.constant 0 : i32
    return %arg0, %arg1, %c0_i32 : i32, i32, i32
  }
  func.func @transform_3(%arg0: i32, %arg1: i32) -> (i32, i32, i32) {
    %c0_i32 = arith.constant 0 : i32
    %c0_i32_0 = arith.constant 0 : i32
    return %arg0, %arg1, %c0_i32 : i32, i32, i32
  }
  func.func @transform_4(%arg0: i32, %arg1: i32) -> (i32, i32) {
    %c0_i32 = arith.constant 0 : i32
    %c0_i32_0 = arith.constant 0 : i32
    %c0_i32_1 = arith.constant 0 : i32
    return %c0_i32, %c0_i32_0 : i32, i32
  }
  func.func @transform_5(%arg0: i32, %arg1: i32) -> (i32, i32) {
    %c0_i32 = arith.constant 0 : i32
    %c0_i32_0 = arith.constant 0 : i32
    %c0_i32_1 = arith.constant 0 : i32
    return %c0_i32, %c0_i32_0 : i32, i32
  }
  func.func @transform_6(%arg0: i32, %arg1: i32) -> (i32, i32) {
    %c0_i32 = arith.constant 0 : i32
    %c0_i32_0 = arith.constant 0 : i32
    %c0_i32_1 = arith.constant 0 : i32
    return %c0_i32, %c0_i32_0 : i32, i32
  }
  func.func @transform_7(%arg0: i32, %arg1: i32) -> (i32, i32) {
    %c0_i32 = arith.constant 0 : i32
    %c0_i32_0 = arith.constant 0 : i32
    %c0_i32_1 = arith.constant 0 : i32
    return %c0_i32, %c0_i32_0 : i32, i32
  }
  func.func @transform_8(%arg0: i32, %arg1: i32) -> (i32, i32) {
    %c0_i32 = arith.constant 0 : i32
    %c0_i32_0 = arith.constant 0 : i32
    %c0_i32_1 = arith.constant 0 : i32
    return %c0_i32, %c0_i32_0 : i32, i32
  }
  func.func @transform_9(%arg0: i32, %arg1: i32) -> (i32, i32) {
    %c0_i32 = arith.constant 0 : i32
    %c0_i32_0 = arith.constant 0 : i32
    %c0_i32_1 = arith.constant 0 : i32
    return %c0_i32, %c0_i32_0 : i32, i32
  }
  func.func @transform_10(%arg0: i32, %arg1: i32) -> (i32, i32) {
    %c0_i32 = arith.constant 0 : i32
    %c0_i32_0 = arith.constant 0 : i32
    %c0_i32_1 = arith.constant 0 : i32
    return %c0_i32, %c0_i32_0 : i32, i32
  }
  func.func @transform_11(%arg0: i32, %arg1: i32) -> (i32, i32) {
    %c0_i32 = arith.constant 0 : i32
    %c0_i32_0 = arith.constant 0 : i32
    %c0_i32_1 = arith.constant 0 : i32
    return %c0_i32, %c0_i32_0 : i32, i32
  }
  func.func @transform_12(%arg0: i32, %arg1: i32) -> (i32, i32) {
    %c0_i32 = arith.constant 0 : i32
    %c0_i32_0 = arith.constant 0 : i32
    %c0_i32_1 = arith.constant 0 : i32
    return %c0_i32, %c0_i32_0 : i32, i32
  }
  func.func @transform_13(%arg0: i32, %arg1: i32) -> (i32, i32) {
    %c0_i32 = arith.constant 0 : i32
    %c0_i32_0 = arith.constant 0 : i32
    %c0_i32_1 = arith.constant 0 : i32
    return %c0_i32, %c0_i32_0 : i32, i32
  }
  func.func @transform_14(%arg0: i32, %arg1: i32) -> (i32, i32) {
    %c0_i32 = arith.constant 0 : i32
    %c0_i32_0 = arith.constant 0 : i32
    %c0_i32_1 = arith.constant 0 : i32
    return %c0_i32, %c0_i32_0 : i32, i32
  }
  func.func @transform_15(%arg0: i32, %arg1: i32) -> (i32, i32) {
    %c0_i32 = arith.constant 0 : i32
    %c0_i32_0 = arith.constant 0 : i32
    %c0_i32_1 = arith.constant 0 : i32
    return %c0_i32, %c0_i32_0 : i32, i32
  }
  func.func @transform_16(%arg0: i32, %arg1: i32) -> (i32, i32) {
    %c0_i32 = arith.constant 0 : i32
    %c0_i32_0 = arith.constant 0 : i32
    %c0_i32_1 = arith.constant 0 : i32
    return %c0_i32, %c0_i32_0 : i32, i32
  }
  func.func @transform_17(%arg0: i32, %arg1: i32) -> (i32, i32) {
    %c0_i32 = arith.constant 0 : i32
    %c0_i32_0 = arith.constant 0 : i32
    %c0_i32_1 = arith.constant 0 : i32
    return %c0_i32, %c0_i32_0 : i32, i32
  }
  func.func @transform_18(%arg0: i32, %arg1: i32) -> (i32, i32) {
    %c0_i32 = arith.constant 0 : i32
    %c0_i32_0 = arith.constant 0 : i32
    %c0_i32_1 = arith.constant 0 : i32
    return %c0_i32, %c0_i32_0 : i32, i32
  }
  func.func @transform_19(%arg0: i32, %arg1: i32) -> (i32, i32, i32) {
    %c0_i32 = arith.constant 0 : i32
    %c0_i32_0 = arith.constant 0 : i32
    return %arg0, %arg1, %c0_i32 : i32, i32, i32
  }
}

</mosaic_0001>

<llo_original>
// kernel: tpu_custom_call.1
$region0: #{tpu_custom_call.1}
  #allocation0 [shape = 'u32[]', space=smem, size = 0x4, offset = 0x4, fixed_abs, tag = 'smem constant byte address 0x4 - core index']
  #allocation1 [shape = 'u32[144,128]{1,0:T(1,128)}', space=vmem, size = 0x12000, scoped, tag = 'internal scratch']
  %s0 = inlined_call_operand.vmem [shape: f32[2,4,8,64], index: 0, kind: input, shape index: {}]
  %s1 = inlined_call_operand.vmem [shape: f32[2,8,32], index: 1, kind: input, shape index: {}]
  %s2 = inlined_call_operand.vmem [shape: f32[2,8,4], index: 2, kind: input, shape index: {}]
  %s3 = inlined_call_operand.vmem [shape: f32[2,8,1], index: 3, kind: input, shape index: {}]
  %s4 = inlined_call_operand.vmem [shape: f32[32,32], index: 4, kind: input, shape index: {}]
  %s5 = inlined_call_operand.vmem [shape: f32[64,32], index: 5, kind: input, shape index: {}]
  %s6 = inlined_call_operand.vmem [shape: f32[1,32], index: 6, kind: input, shape index: {}]
  %s7 = inlined_call_operand.vmem [shape: f32[32,32], index: 7, kind: input, shape index: {}]
  %s8 = inlined_call_operand.vmem [shape: f32[1,32], index: 8, kind: input, shape index: {}]
  %s9 = inlined_call_operand.vmem [shape: f32[32,32], index: 9, kind: input, shape index: {}]
  %s10 = inlined_call_operand.vmem [shape: f32[1,32], index: 10, kind: input, shape index: {}]
  %s11 = inlined_call_operand.vmem [shape: f32[1,32], index: 11, kind: input, shape index: {}]
  %s12 = inlined_call_operand.vmem [shape: f32[1,32], index: 12, kind: input, shape index: {}]
  %s13 = inlined_call_operand.vmem [shape: f32[32,128], index: 13, kind: input, shape index: {}]
  %s14 = inlined_call_operand.vmem [shape: f32[1,128], index: 14, kind: input, shape index: {}]
  %s15 = inlined_call_operand.vmem [shape: f32[128,32], index: 15, kind: input, shape index: {}]
  %s16 = inlined_call_operand.vmem [shape: f32[1,32], index: 16, kind: input, shape index: {}]
  %s17 = inlined_call_operand.vmem [shape: f32[1,32], index: 17, kind: input, shape index: {}]
  %s18 = inlined_call_operand.vmem [shape: f32[1,32], index: 18, kind: input, shape index: {}]
  %s19 = inlined_call_operand.hbm [shape: f32[2,8,32], index: 19, kind: output, shape index: {}]
  %s20 = sld [smem:[#allocation0]]
  $region109: #{tpu_custom_call.1} parent=0
    _
  %s22 = ssub.s32 1, %s20
  %s23 = scalar_select 0, %s22, %s20
  $region1: #{tpu_custom_call.1} parent=0
    #allocation2 [shape = 'u8[8192]{0}', space=vmem, size = 0x2000, scoped, tag = 'output window, operand 0']
    #allocation3 [shape = 's32[2]{0}', space=sflag, size = 0x8, scoped, tag = 'scoped memory for tpu_custom_call.1']
    %24 = vsyncpa [#allocation3], 0
    %s25 = scalar_lea.sflag [#allocation3], 1
    %26 = vsyncpa %s25, 0
    loop: start=0, step=1, limit=4
    $region2: #{tpu_custom_call.1} parent=1 // loop_pre_header
      _
    $region3: #{tpu_custom_call.1} parent=1 // loop_header
      %s28 = sphi 0, %s32
      %p29 = scmp.ge.s32.totalorder %s28, 4
      %s35 = sphi 0, %s47
      %s36 = sphi 0, %s43
      %s37 = sphi 0, %s35
      %s38 = sphi 0, %s36
      %s39 = sphi 0, %s37
      %s40 = sphi 0, %s38
      %s52 = sphi 0, %s54
      %s55 = sphi 0, %s52
      %s56 = sphi 0, %s55
      %s72 = sphi 0, %s56
      %s80 = sphi 0, %s82
      %s83 = sphi 0, %s80
      %s84 = sphi 0, %s83
      %s100 = sphi 0, %s84
      %s108 = sphi 0, %s110
      %s111 = sphi 0, %s108
      %s112 = sphi 0, %s111
      %s128 = sphi 0, %s112
      %s136 = sphi 0, %s138
      %s139 = sphi 0, %s136
      %s140 = sphi 0, %s139
      %s156 = sphi 0, %s140
      %s160 = sphi 0, %s160
      %s162 = sphi 0, %s160
      %s163 = sphi 0, %s162
      %s177 = sphi 0, %s163
      %s181 = sphi 0, %s181
      %s183 = sphi 0, %s181
      %s184 = sphi 0, %s183
      %s198 = sphi 0, %s184
      %s202 = sphi 0, %s202
      %s204 = sphi 0, %s202
      %s205 = sphi 0, %s204
      %s219 = sphi 0, %s205
      %s223 = sphi 0, %s223
      %s225 = sphi 0, %s223
      %s226 = sphi 0, %s225
      %s240 = sphi 0, %s226
      %s244 = sphi 0, %s244
      %s246 = sphi 0, %s244
      %s247 = sphi 0, %s246
      %s261 = sphi 0, %s247
      %s265 = sphi 0, %s265
      %s267 = sphi 0, %s265
      %s268 = sphi 0, %s267
      %s282 = sphi 0, %s268
      %s286 = sphi 0, %s286
      %s288 = sphi 0, %s286
      %s289 = sphi 0, %s288
      %s303 = sphi 0, %s289
      %s307 = sphi 0, %s307
      %s309 = sphi 0, %s307
      %s310 = sphi 0, %s309
      %s324 = sphi 0, %s310
      %s328 = sphi 0, %s328
      %s330 = sphi 0, %s328
      %s331 = sphi 0, %s330
      %s345 = sphi 0, %s331
      %s349 = sphi 0, %s349
      %s351 = sphi 0, %s349
      %s352 = sphi 0, %s351
      %s366 = sphi 0, %s352
      %s370 = sphi 0, %s370
      %s372 = sphi 0, %s370
      %s373 = sphi 0, %s372
      %s387 = sphi 0, %s373
      %s391 = sphi 0, %s391
      %s393 = sphi 0, %s391
      %s394 = sphi 0, %s393
      %s408 = sphi 0, %s394
      %s412 = sphi 0, %s412
      %s414 = sphi 0, %s412
      %s415 = sphi 0, %s414
      %s429 = sphi 0, %s415
      %s433 = sphi 0, %s433
      %s435 = sphi 0, %s433
      %s436 = sphi 0, %s435
      %s450 = sphi 0, %s436
      %s454 = sphi 0, %s454
      %s456 = sphi 0, %s454
      %s457 = sphi 0, %s456
      %s471 = sphi 0, %s457
      %s479 = sphi 0, %s481
      %s482 = sphi 0, %s479
      %s483 = sphi 0, %s482
      %s499 = sphi 0, %s483
    $region4: #{tpu_custom_call.1} parent=1 // loop_header_branch
      %31 = sbr.rel (%p29) target = $region8
    $region5: #{tpu_custom_call.1} parent=1 // loop_body
      %s33 = ssub.s32 %s28, 1
      %s34 = ssub.s32 %s28, 2
      %s41 = sadd.s32 1, %s36
      %p42 = scmp.ge.s32.totalorder %s41, 1
      %s43 = scalar_select %p42, 0, %s41
      %s44 = sadd.s32 1, %s35
      %s45 = scalar_select %p42, %s44, %s35
      %p46 = scmp.ge.s32.totalorder %s45, 2
      %s47 = scalar_select %p46, 0, %s45
      %s48 = ssub.s32 %s35, %s47
      %s49 = ssub.s32 %s36, %s43
      %s50 = sor.u32 %s48, %s49
      %p51 = scmp.eq.s32.totalorder %s50, 0
      %s53 = sadd.s32 %s52, 1
      %s54 = scalar_select %p51, %s52, %s53
      %p57 = pneg %p51
      %p58 = scmp.eq.s32.totalorder %s28, 1
      %p59 = por %p57, %p58
      %p60 = scmp.ne.s32.totalorder %s52, %s55
      %p61 = scmp.eq.s32.totalorder %s28, 0
      %p62 = por %p60, %p61
      %p63 = scmp.ne.s32.totalorder %s52, %s55
      %p64 = scmp.eq.s32.totalorder %s33, 1
      %p65 = por %p63, %p64
      %p66 = scmp.ne.s32.totalorder %s55, %s56
      %p67 = scmp.eq.s32.totalorder %s33, 0
      %p68 = por %p66, %p67
      %p69 = scmp.ne.s32.totalorder %s55, %s56
      %p70 = scmp.eq.s32.totalorder %s34, 1
      %p71 = por %p69, %p70
      %p73 = scmp.ne.s32.totalorder %s56, %s72
      %p74 = scmp.eq.s32.totalorder %s34, 0
      %p75 = por %p73, %p74
      %s76 = ssub.s32 %s35, %s47
      %s77 = ssub.s32 %s36, %s43
      %s78 = sor.u32 %s76, %s77
      %p79 = scmp.eq.s32.totalorder %s78, 0
      %s81 = sadd.s32 %s80, 1
      %s82 = scalar_select %p79, %s80, %s81
      %p85 = pneg %p79
      %p86 = scmp.eq.s32.totalorder %s28, 1
      %p87 = por %p85, %p86
      %p88 = scmp.ne.s32.totalorder %s80, %s83
      %p89 = scmp.eq.s32.totalorder %s28, 0
      %p90 = por %p88, %p89
      %p91 = scmp.ne.s32.totalorder %s80, %s83
      %p92 = scmp.eq.s32.totalorder %s33, 1
      %p93 = por %p91, %p92
      %p94 = scmp.ne.s32.totalorder %s83, %s84
      %p95 = scmp.eq.s32.totalorder %s33, 0
      %p96 = por %p94, %p95
      %p97 = scmp.ne.s32.totalorder %s83, %s84
      %p98 = scmp.eq.s32.totalorder %s34, 1
      %p99 = por %p97, %p98
      %p101 = scmp.ne.s32.totalorder %s84, %s100
      %p102 = scmp.eq.s32.totalorder %s34, 0
      %p103 = por %p101, %p102
      %s104 = ssub.s32 %s35, %s47
      %s105 = ssub.s32 %s36, %s43
      %s106 = sor.u32 %s104, %s105
      %p107 = scmp.eq.s32.totalorder %s106, 0
      %s109 = sadd.s32 %s108, 1
      %s110 = scalar_select %p107, %s108, %s109
      %p113 = pneg %p107
      %p114 = scmp.eq.s32.totalorder %s28, 1
      %p115 = por %p113, %p114
      %p116 = scmp.ne.s32.totalorder %s108, %s111
      %p117 = scmp.eq.s32.totalorder %s28, 0
      %p118 = por %p116, %p117
      %p119 = scmp.ne.s32.totalorder %s108, %s111
      %p120 = scmp.eq.s32.totalorder %s33, 1
      %p121 = por %p119, %p120
      %p122 = scmp.ne.s32.totalorder %s111, %s112
      %p123 = scmp.eq.s32.totalorder %s33, 0
      %p124 = por %p122, %p123
      %p125 = scmp.ne.s32.totalorder %s111, %s112
      %p126 = scmp.eq.s32.totalorder %s34, 1
      %p127 = por %p125, %p126
      %p129 = scmp.ne.s32.totalorder %s112, %s128
      %p130 = scmp.eq.s32.totalorder %s34, 0
      %p131 = por %p129, %p130
      %s132 = ssub.s32 %s35, %s47
      %s133 = ssub.s32 %s36, %s43
      %s134 = sor.u32 %s132, %s133
      %p135 = scmp.eq.s32.totalorder %s134, 0
      %s137 = sadd.s32 %s136, 1
      %s138 = scalar_select %p135, %s136, %s137
      %p141 = pneg %p135
      %p142 = scmp.eq.s32.totalorder %s28, 1
      %p143 = por %p141, %p142
      %p144 = scmp.ne.s32.totalorder %s136, %s139
      %p145 = scmp.eq.s32.totalorder %s28, 0
      %p146 = por %p144, %p145
      %p147 = scmp.ne.s32.totalorder %s136, %s139
      %p148 = scmp.eq.s32.totalorder %s33, 1
      %p149 = por %p147, %p148
      %p150 = scmp.ne.s32.totalorder %s139, %s140
      %p151 = scmp.eq.s32.totalorder %s33, 0
      %p152 = por %p150, %p151
      %p153 = scmp.ne.s32.totalorder %s139, %s140
      %p154 = scmp.eq.s32.totalorder %s34, 1
      %p155 = por %p153, %p154
      %p157 = scmp.ne.s32.totalorder %s140, %s156
      %p158 = scmp.eq.s32.totalorder %s34, 0
      %p159 = por %p157, %p158
      %s161 = sadd.s32 %s160, 1
      %p164 = scmp.eq.s32.totalorder %s28, 1
      %p165 = scmp.ne.s32.totalorder %s160, %s162
      %p166 = scmp.eq.s32.totalorder %s28, 0
      %p167 = por %p165, %p166
      %p168 = scmp.ne.s32.totalorder %s160, %s162
      %p169 = scmp.eq.s32.totalorder %s33, 1
      %p170 = por %p168, %p169
      %p171 = scmp.ne.s32.totalorder %s162, %s163
      %p172 = scmp.eq.s32.totalorder %s33, 0
      %p173 = por %p171, %p172
      %p174 = scmp.ne.s32.totalorder %s162, %s163
      %p175 = scmp.eq.s32.totalorder %s34, 1
      %p176 = por %p174, %p175
      %p178 = scmp.ne.s32.totalorder %s163, %s177
      %p179 = scmp.eq.s32.totalorder %s34, 0
      %p180 = por %p178, %p179
      %s182 = sadd.s32 %s181, 1
      %p185 = scmp.eq.s32.totalorder %s28, 1
      %p186 = scmp.ne.s32.totalorder %s181, %s183
      %p187 = scmp.eq.s32.totalorder %s28, 0
      %p188 = por %p186, %p187
      %p189 = scmp.ne.s32.totalorder %s181, %s183
      %p190 = scmp.eq.s32.totalorder %s33, 1
      %p191 = por %p189, %p190
      %p192 = scmp.ne.s32.totalorder %s183, %s184
      %p193 = scmp.eq.s32.totalorder %s33, 0
      %p194 = por %p192, %p193
      %p195 = scmp.ne.s32.totalorder %s183, %s184
      %p196 = scmp.eq.s32.totalorder %s34, 1
      %p197 = por %p195, %p196
      %p199 = scmp.ne.s32.totalorder %s184, %s198
      %p200 = scmp.eq.s32.totalorder %s34, 0
      %p201 = por %p199, %p200
      %s203 = sadd.s32 %s202, 1
      %p206 = scmp.eq.s32.totalorder %s28, 1
      %p207 = scmp.ne.s32.totalorder %s202, %s204
      %p208 = scmp.eq.s32.totalorder %s28, 0
      %p209 = por %p207, %p208
      %p210 = scmp.ne.s32.totalorder %s202, %s204
      %p211 = scmp.eq.s32.totalorder %s33, 1
      %p212 = por %p210, %p211
      %p213 = scmp.ne.s32.totalorder %s204, %s205
      %p214 = scmp.eq.s32.totalorder %s33, 0
      %p215 = por %p213, %p214
      %p216 = scmp.ne.s32.totalorder %s204, %s205
      %p217 = scmp.eq.s32.totalorder %s34, 1
      %p218 = por %p216, %p217
      %p220 = scmp.ne.s32.totalorder %s205, %s219
      %p221 = scmp.eq.s32.totalorder %s34, 0
      %p222 = por %p220, %p221
      %s224 = sadd.s32 %s223, 1
      %p227 = scmp.eq.s32.totalorder %s28, 1
      %p228 = scmp.ne.s32.totalorder %s223, %s225
      %p229 = scmp.eq.s32.totalorder %s28, 0
      %p230 = por %p228, %p229
      %p231 = scmp.ne.s32.totalorder %s223, %s225
      %p232 = scmp.eq.s32.totalorder %s33, 1
      %p233 = por %p231, %p232
      %p234 = scmp.ne.s32.totalorder %s225, %s226
      %p235 = scmp.eq.s32.totalorder %s33, 0
      %p236 = por %p234, %p235
      %p237 = scmp.ne.s32.totalorder %s225, %s226
      %p238 = scmp.eq.s32.totalorder %s34, 1
      %p239 = por %p237, %p238
      %p241 = scmp.ne.s32.totalorder %s226, %s240
      %p242 = scmp.eq.s32.totalorder %s34, 0
      %p243 = por %p241, %p242
      %s245 = sadd.s32 %s244, 1
      %p248 = scmp.eq.s32.totalorder %s28, 1
      %p249 = scmp.ne.s32.totalorder %s244, %s246
      %p250 = scmp.eq.s32.totalorder %s28, 0
      %p251 = por %p249, %p250
      %p252 = scmp.ne.s32.totalorder %s244, %s246
      %p253 = scmp.eq.s32.totalorder %s33, 1
      %p254 = por %p252, %p253
      %p255 = scmp.ne.s32.totalorder %s246, %s247
      %p256 = scmp.eq.s32.totalorder %s33, 0
      %p257 = por %p255, %p256
      %p258 = scmp.ne.s32.totalorder %s246, %s247
      %p259 = scmp.eq.s32.totalorder %s34, 1
      %p260 = por %p258, %p259
      %p262 = scmp.ne.s32.totalorder %s247, %s261
      %p263 = scmp.eq.s32.totalorder %s34, 0
      %p264 = por %p262, %p263
      %s266 = sadd.s32 %s265, 1
      %p269 = scmp.eq.s32.totalorder %s28, 1
      %p270 = scmp.ne.s32.totalorder %s265, %s267
      %p271 = scmp.eq.s32.totalorder %s28, 0
      %p272 = por %p270, %p271
      %p273 = scmp.ne.s32.totalorder %s265, %s267
      %p274 = scmp.eq.s32.totalorder %s33, 1
      %p275 = por %p273, %p274
      %p276 = scmp.ne.s32.totalorder %s267, %s268
      %p277 = scmp.eq.s32.totalorder %s33, 0
      %p278 = por %p276, %p277
      %p279 = scmp.ne.s32.totalorder %s267, %s268
      %p280 = scmp.eq.s32.totalorder %s34, 1
      %p281 = por %p279, %p280
      %p283 = scmp.ne.s32.totalorder %s268, %s282
      %p284 = scmp.eq.s32.totalorder %s34, 0
      %p285 = por %p283, %p284
      %s287 = sadd.s32 %s286, 1
      %p290 = scmp.eq.s32.totalorder %s28, 1
      %p291 = scmp.ne.s32.totalorder %s286, %s288
      %p292 = scmp.eq.s32.totalorder %s28, 0
      %p293 = por %p291, %p292
      %p294 = scmp.ne.s32.totalorder %s286, %s288
      %p295 = scmp.eq.s32.totalorder %s33, 1
      %p296 = por %p294, %p295
      %p297 = scmp.ne.s32.totalorder %s288, %s289
      %p298 = scmp.eq.s32.totalorder %s33, 0
      %p299 = por %p297, %p298
      %p300 = scmp.ne.s32.totalorder %s288, %s289
      %p301 = scmp.eq.s32.totalorder %s34, 1
      %p302 = por %p300, %p301
      %p304 = scmp.ne.s32.totalorder %s289, %s303
      %p305 = scmp.eq.s32.totalorder %s34, 0
      %p306 = por %p304, %p305
      %s308 = sadd.s32 %s307, 1
      %p311 = scmp.eq.s32.totalorder %s28, 1
      %p312 = scmp.ne.s32.totalorder %s307, %s309
      %p313 = scmp.eq.s32.totalorder %s28, 0
      %p314 = por %p312, %p313
      %p315 = scmp.ne.s32.totalorder %s307, %s309
      %p316 = scmp.eq.s32.totalorder %s33, 1
      %p317 = por %p315, %p316
      %p318 = scmp.ne.s32.totalorder %s309, %s310
      %p319 = scmp.eq.s32.totalorder %s33, 0
      %p320 = por %p318, %p319
      %p321 = scmp.ne.s32.totalorder %s309, %s310
      %p322 = scmp.eq.s32.totalorder %s34, 1
      %p323 = por %p321, %p322
      %p325 = scmp.ne.s32.totalorder %s310, %s324
      %p326 = scmp.eq.s32.totalorder %s34, 0
      %p327 = por %p325, %p326
      %s329 = sadd.s32 %s328, 1
      %p332 = scmp.eq.s32.totalorder %s28, 1
      %p333 = scmp.ne.s32.totalorder %s328, %s330
      %p334 = scmp.eq.s32.totalorder %s28, 0
      %p335 = por %p333, %p334
      %p336 = scmp.ne.s32.totalorder %s328, %s330
      %p337 = scmp.eq.s32.totalorder %s33, 1
      %p338 = por %p336, %p337
      %p339 = scmp.ne.s32.totalorder %s330, %s331
      %p340 = scmp.eq.s32.totalorder %s33, 0
      %p341 = por %p339, %p340
      %p342 = scmp.ne.s32.totalorder %s330, %s331
      %p343 = scmp.eq.s32.totalorder %s34, 1
      %p344 = por %p342, %p343
      %p346 = scmp.ne.s32.totalorder %s331, %s345
      %p347 = scmp.eq.s32.totalorder %s34, 0
      %p348 = por %p346, %p347
      %s350 = sadd.s32 %s349, 1
      %p353 = scmp.eq.s32.totalorder %s28, 1
      %p354 = scmp.ne.s32.totalorder %s349, %s351
      %p355 = scmp.eq.s32.totalorder %s28, 0
      %p356 = por %p354, %p355
      %p357 = scmp.ne.s32.totalorder %s349, %s351
      %p358 = scmp.eq.s32.totalorder %s33, 1
      %p359 = por %p357, %p358
      %p360 = scmp.ne.s32.totalorder %s351, %s352
      %p361 = scmp.eq.s32.totalorder %s33, 0
      %p362 = por %p360, %p361
      %p363 = scmp.ne.s32.totalorder %s351, %s352
      %p364 = scmp.eq.s32.totalorder %s34, 1
      %p365 = por %p363, %p364
      %p367 = scmp.ne.s32.totalorder %s352, %s366
      %p368 = scmp.eq.s32.totalorder %s34, 0
      %p369 = por %p367, %p368
      %s371 = sadd.s32 %s370, 1
      %p374 = scmp.eq.s32.totalorder %s28, 1
      %p375 = scmp.ne.s32.totalorder %s370, %s372
      %p376 = scmp.eq.s32.totalorder %s28, 0
      %p377 = por %p375, %p376
      %p378 = scmp.ne.s32.totalorder %s370, %s372
      %p379 = scmp.eq.s32.totalorder %s33, 1
      %p380 = por %p378, %p379
      %p381 = scmp.ne.s32.totalorder %s372, %s373
      %p382 = scmp.eq.s32.totalorder %s33, 0
      %p383 = por %p381, %p382
      %p384 = scmp.ne.s32.totalorder %s372, %s373
      %p385 = scmp.eq.s32.totalorder %s34, 1
      %p386 = por %p384, %p385
      %p388 = scmp.ne.s32.totalorder %s373, %s387
      %p389 = scmp.eq.s32.totalorder %s34, 0
      %p390 = por %p388, %p389
      %s392 = sadd.s32 %s391, 1
      %p395 = scmp.eq.s32.totalorder %s28, 1
      %p396 = scmp.ne.s32.totalorder %s391, %s393
      %p397 = scmp.eq.s32.totalorder %s28, 0
      %p398 = por %p396, %p397
      %p399 = scmp.ne.s32.totalorder %s391, %s393
      %p400 = scmp.eq.s32.totalorder %s33, 1
      %p401 = por %p399, %p400
      %p402 = scmp.ne.s32.totalorder %s393, %s394
      %p403 = scmp.eq.s32.totalorder %s33, 0
      %p404 = por %p402, %p403
      %p405 = scmp.ne.s32.totalorder %s393, %s394
      %p406 = scmp.eq.s32.totalorder %s34, 1
      %p407 = por %p405, %p406
      %p409 = scmp.ne.s32.totalorder %s394, %s408
      %p410 = scmp.eq.s32.totalorder %s34, 0
      %p411 = por %p409, %p410
      %s413 = sadd.s32 %s412, 1
      %p416 = scmp.eq.s32.totalorder %s28, 1
      %p417 = scmp.ne.s32.totalorder %s412, %s414
      %p418 = scmp.eq.s32.totalorder %s28, 0
      %p419 = por %p417, %p418
      %p420 = scmp.ne.s32.totalorder %s412, %s414
      %p421 = scmp.eq.s32.totalorder %s33, 1
      %p422 = por %p420, %p421
      %p423 = scmp.ne.s32.totalorder %s414, %s415
      %p424 = scmp.eq.s32.totalorder %s33, 0
      %p425 = por %p423, %p424
      %p426 = scmp.ne.s32.totalorder %s414, %s415
      %p427 = scmp.eq.s32.totalorder %s34, 1
      %p428 = por %p426, %p427
      %p430 = scmp.ne.s32.totalorder %s415, %s429
      %p431 = scmp.eq.s32.totalorder %s34, 0
      %p432 = por %p430, %p431
      %s434 = sadd.s32 %s433, 1
      %p437 = scmp.eq.s32.totalorder %s28, 1
      %p438 = scmp.ne.s32.totalorder %s433, %s435
      %p439 = scmp.eq.s32.totalorder %s28, 0
      %p440 = por %p438, %p439
      %p441 = scmp.ne.s32.totalorder %s433, %s435
      %p442 = scmp.eq.s32.totalorder %s33, 1
      %p443 = por %p441, %p442
      %p444 = scmp.ne.s32.totalorder %s435, %s436
      %p445 = scmp.eq.s32.totalorder %s33, 0
      %p446 = por %p444, %p445
      %p447 = scmp.ne.s32.totalorder %s435, %s436
      %p448 = scmp.eq.s32.totalorder %s34, 1
      %p449 = por %p447, %p448
      %p451 = scmp.ne.s32.totalorder %s436, %s450
      %p452 = scmp.eq.s32.totalorder %s34, 0
      %p453 = por %p451, %p452
      %s455 = sadd.s32 %s454, 1
      %p458 = scmp.eq.s32.totalorder %s28, 1
      %p459 = scmp.ne.s32.totalorder %s454, %s456
      %p460 = scmp.eq.s32.totalorder %s28, 0
      %p461 = por %p459, %p460
      %p462 = scmp.ne.s32.totalorder %s454, %s456
      %p463 = scmp.eq.s32.totalorder %s33, 1
      %p464 = por %p462, %p463
      %p465 = scmp.ne.s32.totalorder %s456, %s457
      %p466 = scmp.eq.s32.totalorder %s33, 0
      %p467 = por %p465, %p466
      %p468 = scmp.ne.s32.totalorder %s456, %s457
      %p469 = scmp.eq.s32.totalorder %s34, 1
      %p470 = por %p468, %p469
      %p472 = scmp.ne.s32.totalorder %s457, %s471
      %p473 = scmp.eq.s32.totalorder %s34, 0
      %p474 = por %p472, %p473
      %s475 = ssub.s32 %s35, %s47
      %s476 = ssub.s32 %s36, %s43
      %s477 = sor.u32 %s475, %s476
      %p478 = scmp.eq.s32.totalorder %s477, 0
      %s480 = sadd.s32 %s479, 1
      %s481 = scalar_select %p478, %s479, %s480
      %p484 = pneg %p478
      %p485 = scmp.eq.s32.totalorder %s28, 1
      %p486 = por %p484, %p485
      %p487 = scmp.ne.s32.totalorder %s479, %s482
      %p488 = scmp.eq.s32.totalorder %s28, 0
      %p489 = por %p487, %p488
      %p490 = scmp.ne.s32.totalorder %s479, %s482
      %p491 = scmp.eq.s32.totalorder %s33, 1
      %p492 = por %p490, %p491
      %p493 = scmp.ne.s32.totalorder %s482, %s483
      %p494 = scmp.eq.s32.totalorder %s33, 0
      %p495 = por %p493, %p494
      %p496 = scmp.ne.s32.totalorder %s482, %s483
      %p497 = scmp.eq.s32.totalorder %s34, 1
      %p498 = por %p496, %p497
      %p500 = scmp.ne.s32.totalorder %s483, %s499
      %p501 = scmp.eq.s32.totalorder %s34, 0
      %p502 = por %p500, %p501
      %p503 = scmp.le.s32.totalorder 1, %s28
      %p504 = scmp.lt.s32.totalorder %s28, 3
      %p505 = pnand %p503, %p504
      %p506 = pneg %p505
      // Predicated region
      $region9: #{tpu_custom_call.1} parent=5 // pred_check
        _
      $region10: #{tpu_custom_call.1} parent=5 // pred_check_branch
        %508 = sbr.rel (%p505) target = $region12
      $region11: #{tpu_custom_call.1} parent=5 // pred_region
        %s509 = ssub.s32 %s28, 1
        // Predicated region
        $region13: #{tpu_custom_call.1} parent=11 // pred_check
          %p510 = pneg %p173
        $region14: #{tpu_custom_call.1} parent=11 // pred_check_branch
          %512 = sbr.rel (%p510) target = $region16
        $region15: #{tpu_custom_call.1} parent=11 // pred_region
          _
        $region16: #{tpu_custom_call.1} parent=11 // pred_fallthru
          _
        // Predicated region
        $region17: #{tpu_custom_call.1} parent=11 // pred_check
          %p513 = pneg %p194
        $region18: #{tpu_custom_call.1} parent=11 // pred_check_branch
          %515 = sbr.rel (%p513) target = $region20
        $region19: #{tpu_custom_call.1} parent=11 // pred_region
          _
        $region20: #{tpu_custom_call.1} parent=11 // pred_fallthru
          _
        // Predicated region
        $region21: #{tpu_custom_call.1} parent=11 // pred_check
          %p516 = pneg %p215
        $region22: #{tpu_custom_call.1} parent=11 // pred_check_branch
          %518 = sbr.rel (%p516) target = $region24
        $region23: #{tpu_custom_call.1} parent=11 // pred_region
          _
        $region24: #{tpu_custom_call.1} parent=11 // pred_fallthru
          _
        // Predicated region
        $region25: #{tpu_custom_call.1} parent=11 // pred_check
          %p519 = pneg %p236
        $region26: #{tpu_custom_call.1} parent=11 // pred_check_branch
          %521 = sbr.rel (%p519) target = $region28
        $region27: #{tpu_custom_call.1} parent=11 // pred_region
          _
        $region28: #{tpu_custom_call.1} parent=11 // pred_fallthru
          _
        // Predicated region
        $region29: #{tpu_custom_call.1} parent=11 // pred_check
          %p522 = pneg %p257
        $region30: #{tpu_custom_call.1} parent=11 // pred_check_branch
          %524 = sbr.rel (%p522) target = $region32
        $region31: #{tpu_custom_call.1} parent=11 // pred_region
          _
        $region32: #{tpu_custom_call.1} parent=11 // pred_fallthru
          _
        // Predicated region
        $region33: #{tpu_custom_call.1} parent=11 // pred_check
          %p525 = pneg %p278
        $region34: #{tpu_custom_call.1} parent=11 // pred_check_branch
          %527 = sbr.rel (%p525) target = $region36
        $region35: #{tpu_custom_call.1} parent=11 // pred_region
          _
        $region36: #{tpu_custom_call.1} parent=11 // pred_fallthru
          _
        // Predicated region
        $region37: #{tpu_custom_call.1} parent=11 // pred_check
          %p528 = pneg %p299
        $region38: #{tpu_custom_call.1} parent=11 // pred_check_branch
          %530 = sbr.rel (%p528) target = $region40
        $region39: #{tpu_custom_call.1} parent=11 // pred_region
          _
        $region40: #{tpu_custom_call.1} parent=11 // pred_fallthru
          _
        // Predicated region
        $region41: #{tpu_custom_call.1} parent=11 // pred_check
          %p531 = pneg %p320
        $region42: #{tpu_custom_call.1} parent=11 // pred_check_branch
          %533 = sbr.rel (%p531) target = $region44
        $region43: #{tpu_custom_call.1} parent=11 // pred_region
          _
        $region44: #{tpu_custom_call.1} parent=11 // pred_fallthru
          _
        // Predicated region
        $region45: #{tpu_custom_call.1} parent=11 // pred_check
          %p534 = pneg %p341
        $region46: #{tpu_custom_call.1} parent=11 // pred_check_branch
          %536 = sbr.rel (%p534) target = $region48
        $region47: #{tpu_custom_call.1} parent=11 // pred_region
          _
        $region48: #{tpu_custom_call.1} parent=11 // pred_fallthru
          _
        // Predicated region
        $region49: #{tpu_custom_call.1} parent=11 // pred_check
          %p537 = pneg %p362
        $region50: #{tpu_custom_call.1} parent=11 // pred_check_branch
          %539 = sbr.rel (%p537) target = $region52
        $region51: #{tpu_custom_call.1} parent=11 // pred_region
          _
        $region52: #{tpu_custom_call.1} parent=11 // pred_fallthru
          _
        // Predicated region
        $region53: #{tpu_custom_call.1} parent=11 // pred_check
          %p540 = pneg %p383
        $region54: #{tpu_custom_call.1} parent=11 // pred_check_branch
          %542 = sbr.rel (%p540) target = $region56
        $region55: #{tpu_custom_call.1} parent=11 // pred_region
          _
        $region56: #{tpu_custom_call.1} parent=11 // pred_fallthru
          _
        // Predicated region
        $region57: #{tpu_custom_call.1} parent=11 // pred_check
          %p543 = pneg %p404
        $region58: #{tpu_custom_call.1} parent=11 // pred_check_branch
          %545 = sbr.rel (%p543) target = $region60
        $region59: #{tpu_custom_call.1} parent=11 // pred_region
          _
        $region60: #{tpu_custom_call.1} parent=11 // pred_fallthru
          _
        // Predicated region
        $region61: #{tpu_custom_call.1} parent=11 // pred_check
          %p546 = pneg %p425
        $region62: #{tpu_custom_call.1} parent=11 // pred_check_branch
          %548 = sbr.rel (%p546) target = $region64
        $region63: #{tpu_custom_call.1} parent=11 // pred_region
          _
        $region64: #{tpu_custom_call.1} parent=11 // pred_fallthru
          _
        // Predicated region
        $region65: #{tpu_custom_call.1} parent=11 // pred_check
          %p549 = pneg %p446
        $region66: #{tpu_custom_call.1} parent=11 // pred_check_branch
          %551 = sbr.rel (%p549) target = $region68
        $region67: #{tpu_custom_call.1} parent=11 // pred_region
          _
        $region68: #{tpu_custom_call.1} parent=11 // pred_fallthru
          _
        // Predicated region
        $region69: #{tpu_custom_call.1} parent=11 // pred_check
          %p552 = pneg %p467
        $region70: #{tpu_custom_call.1} parent=11 // pred_check_branch
          %554 = sbr.rel (%p552) target = $region72
        $region71: #{tpu_custom_call.1} parent=11 // pred_region
          _
        $region72: #{tpu_custom_call.1} parent=11 // pred_fallthru
          _
      $region12: #{tpu_custom_call.1} parent=5 // pred_fallthru
        _
      %p555 = scmp.lt.s32.totalorder %s28, 2
      // Predicated region
      $region73: #{tpu_custom_call.1} parent=5 // pred_check
        %p556 = pneg %p555
      $region74: #{tpu_custom_call.1} parent=5 // pred_check_branch
        %558 = sbr.rel (%p556) target = $region76
      $region75: #{tpu_custom_call.1} parent=5 // pred_region
        // Predicated region
        $region77: #{tpu_custom_call.1} parent=75 // pred_check
          %p559 = pneg %p62
        $region78: #{tpu_custom_call.1} parent=75 // pred_check_branch
          %561 = sbr.rel (%p559) target = $region80
        $region79: #{tpu_custom_call.1} parent=75 // pred_region
          %p562 = scmp.lt.s32.totalorder %s35, 1
          %s563 = scalar_select %p562, %s35, 1
          %p564 = scmp.lt.s32.totalorder %s36, 0
          %s565 = scalar_select %p564, %s36, 0
          %s566 = smul.addr %s563, 4
          %s567 = sadd.s32 %s565, %s566
          %s568 = smul.addr %s567, 8
          %s569 = scalar_lea.vmem %s0, %s568
        $region80: #{tpu_custom_call.1} parent=75 // pred_fallthru
          _
        // Predicated region
        $region81: #{tpu_custom_call.1} parent=75 // pred_check
          %p570 = pneg %p90
        $region82: #{tpu_custom_call.1} parent=75 // pred_check_branch
          %572 = sbr.rel (%p570) target = $region84
        $region83: #{tpu_custom_call.1} parent=75 // pred_region
          %p573 = scmp.lt.s32.totalorder %s35, 1
          %s574 = scalar_select %p573, %s35, 1
          %p575 = scmp.lt.s32.totalorder %s36, 0
          %s576 = scalar_select %p575, %s36, 0
          %s577 = sadd.s32 %s576, %s574
          %s578 = smul.addr %s577, 8
          %s579 = scalar_lea.vmem %s1, %s578
        $region84: #{tpu_custom_call.1} parent=75 // pred_fallthru
          _
        // Predicated region
        $region85: #{tpu_custom_call.1} parent=75 // pred_check
          %p580 = pneg %p118
        $region86: #{tpu_custom_call.1} parent=75 // pred_check_branch
          %582 = sbr.rel (%p580) target = $region88
        $region87: #{tpu_custom_call.1} parent=75 // pred_region
          %p583 = scmp.lt.s32.totalorder %s35, 1
          %s584 = scalar_select %p583, %s35, 1
          %p585 = scmp.lt.s32.totalorder %s36, 0
          %s586 = scalar_select %p585, %s36, 0
          %s587 = sadd.s32 %s586, %s584
          %s588 = smul.addr %s587, 8
          %s589 = scalar_lea.vmem %s2, %s588
        $region88: #{tpu_custom_call.1} parent=75 // pred_fallthru
          _
        // Predicated region
        $region89: #{tpu_custom_call.1} parent=75 // pred_check
          %p590 = pneg %p146
        $region90: #{tpu_custom_call.1} parent=75 // pred_check_branch
          %592 = sbr.rel (%p590) target = $region92
        $region91: #{tpu_custom_call.1} parent=75 // pred_region
          %p593 = scmp.lt.s32.totalorder %s35, 1
          %s594 = scalar_select %p593, %s35, 1
          %p595 = scmp.lt.s32.totalorder %s36, 0
          %s596 = scalar_select %p595, %s36, 0
          %s597 = sadd.s32 %s596, %s594
          %s598 = smul.addr %s597, 8
          %s599 = scalar_lea.vmem %s3, %s598
        $region92: #{tpu_custom_call.1} parent=75 // pred_fallthru
          _
      $region76: #{tpu_custom_call.1} parent=5 // pred_fallthru
        _
      %p600 = scmp.le.s32.totalorder 1, %s28
      %p601 = scmp.lt.s32.totalorder %s28, 3
      %p602 = pnand %p600, %p601
      %p603 = pneg %p602
      // Predicated region
      $region93: #{tpu_custom_call.1} parent=5 // pred_check
        _
      $region94: #{tpu_custom_call.1} parent=5 // pred_check_branch
        %605 = sbr.rel (%p602) target = $region96
      $region95: #{tpu_custom_call.1} parent=5 // pred_region
        %s606 = ssub.s32 %s28, 1
        %p607 = scmp.lt.s32.totalorder %s37, 1
        %s608 = scalar_select %p607, %s37, 1
        %p609 = scmp.lt.s32.totalorder %s38, 0
        %s610 = scalar_select %p609, %s38, 0
        %s611 = smul.addr %s608, 4
        %s612 = sadd.s32 %s610, %s611
        %s613 = smul.addr %s612, 8
        %s614 = scalar_lea.vmem %s0, %s613
        %p615 = pneg %p68
        %p616 = pneg %p65
        %p617 = scmp.lt.s32.totalorder %s37, 1
        %s618 = scalar_select %p617, %s37, 1
        %p619 = scmp.lt.s32.totalorder %s38, 0
        %s620 = scalar_select %p619, %s38, 0
        %s621 = sadd.s32 %s620, %s618
        %s622 = smul.addr %s621, 8
        %s623 = scalar_lea.vmem %s1, %s622
        %p624 = pneg %p96
        %p625 = pneg %p93
        %p626 = scmp.lt.s32.totalorder %s37, 1
        %s627 = scalar_select %p626, %s37, 1
        %p628 = scmp.lt.s32.totalorder %s38, 0
        %s629 = scalar_select %p628, %s38, 0
        %s630 = sadd.s32 %s629, %s627
        %s631 = smul.addr %s630, 8
        %s632 = scalar_lea.vmem %s2, %s631
        %p633 = pneg %p124
        %p634 = pneg %p121
        %p635 = scmp.lt.s32.totalorder %s37, 1
        %s636 = scalar_select %p635, %s37, 1
        %p637 = scmp.lt.s32.totalorder %s38, 0
        %s638 = scalar_select %p637, %s38, 0
        %s639 = sadd.s32 %s638, %s636
        %s640 = smul.addr %s639, 8
        %s641 = scalar_lea.vmem %s3, %s640
        %p642 = pneg %p152
        %p643 = pneg %p149
        %p644 = pneg %p173
        %p645 = pneg %p170
        %p646 = pneg %p194
        %p647 = pneg %p191
        %p648 = pneg %p215
        %p649 = pneg %p212
        %p650 = pneg %p236
        %p651 = pneg %p233
        %p652 = pneg %p257
        %p653 = pneg %p254
        %p654 = pneg %p278
        %p655 = pneg %p275
        %p656 = pneg %p299
        %p657 = pneg %p296
        %p658 = pneg %p320
        %p659 = pneg %p317
        %p660 = pneg %p341
        %p661 = pneg %p338
        %p662 = pneg %p362
        %p663 = pneg %p359
        %p664 = pneg %p383
        %p665 = pneg %p380
        %p666 = pneg %p404
        %p667 = pneg %p401
        %p668 = pneg %p425
        %p669 = pneg %p422
        %p670 = pneg %p446
        %p671 = pneg %p443
        %p672 = pneg %p467
        %p673 = pneg %p464
        %p674 = pneg %p495
        %p675 = pneg %p492
        %s676 = sand.u32 %s482, 1
        %s677 = scalar_lea.sflag [#allocation3], %s676
        %s678 = sand.u32 %s482, 1
        %s679 = smul.addr %s678, 8
        %s680 = scalar_lea.vmem [#allocation2], %s679
        %p681 = scmp.lt.s32.totalorder %s37, 1
        %s682 = scalar_select %p681, %s37, 1
        %p683 = scmp.lt.s32.totalorder %s38, 0
        %s684 = scalar_select %p683, %s38, 0
        %s685 = smul.addr %s682, 4
        %s686 = sadd.s32 %s684, %s685
        %s687 = smul.addr %s686, 8
        %s688 = scalar_lea.vmem %s0, %s687
        %p689 = scmp.lt.s32.totalorder %s37, 1
        %s690 = scalar_select %p689, %s37, 1
        %p691 = scmp.lt.s32.totalorder %s38, 0
        %s692 = scalar_select %p691, %s38, 0
        %s693 = sadd.s32 %s692, %s690
        %s694 = smul.addr %s693, 8
        %s695 = scalar_lea.vmem %s1, %s694
        %p696 = scmp.lt.s32.totalorder %s37, 1
        %s697 = scalar_select %p696, %s37, 1
        %p698 = scmp.lt.s32.totalorder %s38, 0
        %s699 = scalar_select %p698, %s38, 0
        %s700 = sadd.s32 %s699, %s697
        %s701 = smul.addr %s700, 8
        %s702 = scalar_lea.vmem %s2, %s701
        %p703 = scmp.lt.s32.totalorder %s37, 1
        %s704 = scalar_select %p703, %s37, 1
        %p705 = scmp.lt.s32.totalorder %s38, 0
        %s706 = scalar_select %p705, %s38, 0
        %s707 = sadd.s32 %s706, %s704
        %s708 = smul.addr %s707, 8
        %s709 = scalar_lea.vmem %s3, %s708
        %v710 = vld [vmem:[%s695] sm:$0xff]
        %v711 = vld [vmem:[%s702] sm:$0xff]
        %v712 = vld [vmem:[%s5] sm:$0xff]
        %v713 = vld [vmem:[%s5 + $0x8] sm:$0xff]
        %v714 = vld [vmem:[%s5 + $0x10] sm:$0xff]
        %v715 = vld [vmem:[%s5 + $0x18] sm:$0xff]
        %v716 = vld [vmem:[%s5 + $0x20] sm:$0xff]
        %v717 = vld [vmem:[%s5 + $0x28] sm:$0xff]
        %v718 = vld [vmem:[%s5 + $0x30] sm:$0xff]
        %v719 = vld [vmem:[%s5 + $0x38] sm:$0xff]
        %v720 = vld [vmem:[%s7] sm:$0xff]
        %v721 = vld [vmem:[%s7 + $0x8] sm:$0xff]
        %v722 = vld [vmem:[%s7 + $0x10] sm:$0xff]
        %v723 = vld [vmem:[%s7 + $0x18] sm:$0xff]
        %v724 = vld [vmem:[%s9] sm:$0xff]
        %v725 = vld [vmem:[%s9 + $0x8] sm:$0xff]
        %v726 = vld [vmem:[%s9 + $0x10] sm:$0xff]
        %v727 = vld [vmem:[%s9 + $0x18] sm:$0xff]
        %v728 = vld [vmem:[%s6] sm:$0x1]
        %v729 = vld [vmem:[%s8] sm:$0x1]
        %v730 = vld [vmem:[%s10] sm:$0x1]
        %v731 = vld [vmem:[%s4] sm:$0xff]
        %v732 = vld [vmem:[%s4 + $0x8] sm:$0xff]
        %v733 = vld [vmem:[%s4 + $0x10] sm:$0xff]
        %v734 = vld [vmem:[%s4 + $0x18] sm:$0xff]
        %vm735 = vcmask 261120
        %v737 = vsel %vm735, %v710, 0
        %739 = vmatprep.subr.mxu0 0.0
        %740 = vmatpush1.msra.mxu0 0.0
        %741 = vmatprep.subr.mxu0 0.0
        %742 = vmatpush1.msra.mxu0 0.0
        %743 = vmatprep.subr.mxu0 0.0
        %744 = vmatpush1.msra.mxu0 0.0
        %745 = vmatprep.subr.mxu0 0.0
        %746 = vmatpush1.msra.mxu0 0.0
        %747 = vmatprep.subr.mxu0 0.0
        %748 = vmatpush1.msra.mxu0 0.0
        %749 = vmatprep.subr.mxu0 0.0
        %750 = vmatpush1.msra.mxu0 0.0
        %751 = vmatprep.subr.mxu0 0.0
        %752 = vmatpush1.msra.mxu0 0.0
        %753 = vmatprep.subr.mxu0 0.0
        %754 = vmatpush1.msra.mxu0 0.0
        %755 = vmatprep.subr.mxu0 0.0
        %756 = vmatpush1.msra.mxu0 0.0
        %757 = vmatprep.subr.mxu0 0.0
        %758 = vmatpush1.msra.mxu0 0.0
        %759 = vmatprep.subr.mxu0 0.0
        %760 = vmatpush1.msra.mxu0 0.0
        %761 = vmatprep.subr.mxu0 0.0
        %762 = vmatpush1.msra.mxu0 0.0
        %763 = vmatprep.subr.mxu0 0.0
        %764 = vmatpush1.msra.mxu0 %v734
        %765 = vmatprep.subr.mxu0 0.0
        %766 = vmatpush1.msra.mxu0 %v733
        %767 = vmatprep.subr.mxu0 0.0
        %768 = vmatpush1.msra.mxu0 %v732
        %769 = vmatprep.subr.mxu0 0.0
        %770 = vmatpush1.msra.mxu0 %v731
        %771 = vmatprep.subr.mxu0 0.0
        %772 = vmatpush2.msra.mxu0 0.0
        %773 = vmatprep.subr.mxu0 0.0
        %774 = vmatpush2.msra.mxu0 0.0
        %775 = vmatprep.subr.mxu0 0.0
        %776 = vmatpush2.msra.mxu0 0.0
        %777 = vmatprep.subr.mxu0 0.0
        %778 = vmatpush2.msra.mxu0 0.0
        %779 = vmatprep.subr.mxu0 0.0
        %780 = vmatpush2.msra.mxu0 0.0
        %781 = vmatprep.subr.mxu0 0.0
        %782 = vmatpush2.msra.mxu0 0.0
        %783 = vmatprep.subr.mxu0 0.0
        %784 = vmatpush2.msra.mxu0 0.0
        %785 = vmatprep.subr.mxu0 0.0
        %786 = vmatpush2.msra.mxu0 0.0
        %787 = vmatprep.subr.mxu0 0.0
        %788 = vmatpush2.msra.mxu0 0.0
        %789 = vmatprep.subr.mxu0 0.0
        %790 = vmatpush2.msra.mxu0 0.0
        %791 = vmatprep.subr.mxu0 0.0
        %792 = vmatpush2.msra.mxu0 0.0
        %793 = vmatprep.subr.mxu0 0.0
        %794 = vmatpush2.msra.mxu0 0.0
        %795 = vmatprep.subr.mxu0 0.0
        %796 = vmatpush2.msra.mxu0 0.0
        %797 = vmatprep.subr.mxu0 0.0
        %798 = vmatpush2.msra.mxu0 0.0
        %799 = vmatprep.subr.mxu0 0.0
        %800 = vmatpush2.msra.mxu0 0.0
        %801 = vmatprep.subr.mxu0 0.0
        %802 = vmatpush2.msra.mxu0 0.0
        %803 = vmatprep.mubr.f32.mxu0 0.0
        %804 = vmatmul.mubr.f32.gmra.mxu0 %v737
        %v805 = vpop.f32.mrf.mxu0
        %v806 = vadd.f32 0.0, %v805
        %v807 = vpop.f32.mrf.mxu0
        %808 = vdwg.mxu0
        %v809 = vld [vmem:[%s688] sm:$0xff]
        %vm810 = vcmask 523264
        %v812 = vsel %vm810, %v809, 0
        %814 = vmatprep.subr.mxu0 0.0
        %815 = vmatpush1.msra.mxu0 0.0
        %816 = vmatprep.subr.mxu0 0.0
        %817 = vmatpush1.msra.mxu0 0.0
        %818 = vmatprep.subr.mxu0 0.0
        %819 = vmatpush1.msra.mxu0 0.0
        %820 = vmatprep.subr.mxu0 0.0
        %821 = vmatpush1.msra.mxu0 0.0
        %822 = vmatprep.subr.mxu0 0.0
        %823 = vmatpush1.msra.mxu0 0.0
        %824 = vmatprep.subr.mxu0 0.0
        %825 = vmatpush1.msra.mxu0 0.0
        %826 = vmatprep.subr.mxu0 0.0
        %827 = vmatpush1.msra.mxu0 0.0
        %828 = vmatprep.subr.mxu0 0.0
        %829 = vmatpush1.msra.mxu0 0.0
        %830 = vmatprep.subr.mxu0 0.0
        %831 = vmatpush1.msra.mxu0 %v719
        %832 = vmatprep.subr.mxu0 0.0
        %833 = vmatpush1.msra.mxu0 %v718
        %834 = vmatprep.subr.mxu0 0.0
        %835 = vmatpush1.msra.mxu0 %v717
        %836 = vmatprep.subr.mxu0 0.0
        %837 = vmatpush1.msra.mxu0 %v716
        %838 = vmatprep.subr.mxu0 0.0
        %839 = vmatpush1.msra.mxu0 %v715
        %840 = vmatprep.subr.mxu0 0.0
        %841 = vmatpush1.msra.mxu0 %v714
        %842 = vmatprep.subr.mxu0 0.0
        %843 = vmatpush1.msra.mxu0 %v713
        %844 = vmatprep.subr.mxu0 0.0
        %845 = vmatpush1.msra.mxu0 %v712
        %846 = vmatprep.subr.mxu0 0.0
        %847 = vmatpush2.msra.mxu0 0.0
        %848 = vmatprep.subr.mxu0 0.0
        %849 = vmatpush2.msra.mxu0 0.0
        %850 = vmatprep.subr.mxu0 0.0
        %851 = vmatpush2.msra.mxu0 0.0
        %852 = vmatprep.subr.mxu0 0.0
        %853 = vmatpush2.msra.mxu0 0.0
        %854 = vmatprep.subr.mxu0 0.0
        %855 = vmatpush2.msra.mxu0 0.0
        %856 = vmatprep.subr.mxu0 0.0
        %857 = vmatpush2.msra.mxu0 0.0
        %858 = vmatprep.subr.mxu0 0.0
        %859 = vmatpush2.msra.mxu0 0.0
        %860 = vmatprep.subr.mxu0 0.0
        %861 = vmatpush2.msra.mxu0 0.0
        %862 = vmatprep.subr.mxu0 0.0
        %863 = vmatpush2.msra.mxu0 0.0
        %864 = vmatprep.subr.mxu0 0.0
        %865 = vmatpush2.msra.mxu0 0.0
        %866 = vmatprep.subr.mxu0 0.0
        %867 = vmatpush2.msra.mxu0 0.0
        %868 = vmatprep.subr.mxu0 0.0
        %869 = vmatpush2.msra.mxu0 0.0
        %870 = vmatprep.subr.mxu0 0.0
        %871 = vmatpush2.msra.mxu0 0.0
        %872 = vmatprep.subr.mxu0 0.0
        %873 = vmatpush2.msra.mxu0 0.0
        %874 = vmatprep.subr.mxu0 0.0
        %875 = vmatpush2.msra.mxu0 0.0
        %876 = vmatprep.subr.mxu0 0.0
        %877 = vmatpush2.msra.mxu0 0.0
        %878 = vmatprep.mubr.f32.mxu0 0.0
        %879 = vmatmul.mubr.f32.gmra.mxu0 %v812
        %v880 = vpop.f32.mrf.mxu0
        %v881 = vadd.f32 %v806, %v880
        %v882 = vpop.f32.mrf.mxu0
        %883 = vdwg.mxu0
        %v885 = vlaneseq
        %v886 = vshrl.u32 %v885, 7
        %v887 = vsub.s32 0, %v886
        %v888 = vrot.slane %v728, %v887
        %v890 = vadd.f32 %v881, %v888
        %v891 = vmul.f32 %v890, 0.5
        %v892 = vmul.f32 %v890, 0.70710677
        %v893 = verf.f32.pop %v892
        %v894 = vadd.f32 %v893, 1.0
        %v895 = vmul.f32 %v891, %v894
        %v897 = vlaneseq
        %v898 = vshrl.u32 %v897, 7
        %v899 = vsub.s32 0, %v898
        %v900 = vrot.slane %v729, %v899
        %v903 = vsel %vm735, %v895, 0
        %905 = vmatprep.subr.mxu0 0.0
        %906 = vmatpush1.msra.mxu0 0.0
        %907 = vmatprep.subr.mxu0 0.0
        %908 = vmatpush1.msra.mxu0 0.0
        %909 = vmatprep.subr.mxu0 0.0
        %910 = vmatpush1.msra.mxu0 0.0
        %911 = vmatprep.subr.mxu0 0.0
        %912 = vmatpush1.msra.mxu0 0.0
        %913 = vmatprep.subr.mxu0 0.0
        %914 = vmatpush1.msra.mxu0 0.0
        %915 = vmatprep.subr.mxu0 0.0
        %916 = vmatpush1.msra.mxu0 0.0
        %917 = vmatprep.subr.mxu0 0.0
        %918 = vmatpush1.msra.mxu0 0.0
        %919 = vmatprep.subr.mxu0 0.0
        %920 = vmatpush1.msra.mxu0 0.0
        %921 = vmatprep.subr.mxu0 0.0
        %922 = vmatpush1.msra.mxu0 0.0
        %923 = vmatprep.subr.mxu0 0.0
        %924 = vmatpush1.msra.mxu0 0.0
        %925 = vmatprep.subr.mxu0 0.0
        %926 = vmatpush1.msra.mxu0 0.0
        %927 = vmatprep.subr.mxu0 0.0
        %928 = vmatpush1.msra.mxu0 0.0
        %929 = vmatprep.subr.mxu0 0.0
        %930 = vmatpush1.msra.mxu0 %v723
        %931 = vmatprep.subr.mxu0 0.0
        %932 = vmatpush1.msra.mxu0 %v722
        %933 = vmatprep.subr.mxu0 0.0
        %934 = vmatpush1.msra.mxu0 %v721
        %935 = vmatprep.subr.mxu0 0.0
        %936 = vmatpush1.msra.mxu0 %v720
        %937 = vmatprep.subr.mxu0 0.0
        %938 = vmatpush2.msra.mxu0 0.0
        %939 = vmatprep.subr.mxu0 0.0
        %940 = vmatpush2.msra.mxu0 0.0
        %941 = vmatprep.subr.mxu0 0.0
        %942 = vmatpush2.msra.mxu0 0.0
        %943 = vmatprep.subr.mxu0 0.0
        %944 = vmatpush2.msra.mxu0 0.0
        %945 = vmatprep.subr.mxu0 0.0
        %946 = vmatpush2.msra.mxu0 0.0
        %947 = vmatprep.subr.mxu0 0.0
        %948 = vmatpush2.msra.mxu0 0.0
        %949 = vmatprep.subr.mxu0 0.0
        %950 = vmatpush2.msra.mxu0 0.0
        %951 = vmatprep.subr.mxu0 0.0
        %952 = vmatpush2.msra.mxu0 0.0
        %953 = vmatprep.subr.mxu0 0.0
        %954 = vmatpush2.msra.mxu0 0.0
        %955 = vmatprep.subr.mxu0 0.0
        %956 = vmatpush2.msra.mxu0 0.0
        %957 = vmatprep.subr.mxu0 0.0
        %958 = vmatpush2.msra.mxu0 0.0
        %959 = vmatprep.subr.mxu0 0.0
        %960 = vmatpush2.msra.mxu0 0.0
        %961 = vmatprep.subr.mxu0 0.0
        %962 = vmatpush2.msra.mxu0 0.0
        %963 = vmatprep.subr.mxu0 0.0
        %964 = vmatpush2.msra.mxu0 0.0
        %965 = vmatprep.subr.mxu0 0.0
        %966 = vmatpush2.msra.mxu0 0.0
        %967 = vmatprep.subr.mxu0 0.0
        %968 = vmatpush2.msra.mxu0 0.0
        %969 = vmatprep.mubr.f32.mxu0 0.0
        %970 = vmatmul.mubr.f32.gmra.mxu0 %v903
        %v971 = vpop.f32.mrf.mxu0
        %v972 = vadd.f32 %v900, %v971
        %v973 = vpop.f32.mrf.mxu0
        %974 = vdwg.mxu0
        %v975 = vmul.f32 %v972, 0.5
        %v976 = vmul.f32 %v972, 0.70710677
        %v977 = verf.f32.pop %v976
        %v978 = vadd.f32 %v977, 1.0
        %v979 = vmul.f32 %v975, %v978
        %v981 = vlaneseq
        %v982 = vshrl.u32 %v981, 7
        %v983 = vsub.s32 0, %v982
        %v984 = vrot.slane %v730, %v983
        %v987 = vsel %vm735, %v979, 0
        %989 = vmatprep.subr.mxu0 0.0
        %990 = vmatpush1.msra.mxu0 0.0
        %991 = vmatprep.subr.mxu0 0.0
        %992 = vmatpush1.msra.mxu0 0.0
        %993 = vmatprep.subr.mxu0 0.0
        %994 = vmatpush1.msra.mxu0 0.0
        %995 = vmatprep.subr.mxu0 0.0
        %996 = vmatpush1.msra.mxu0 0.0
        %997 = vmatprep.subr.mxu0 0.0
        %998 = vmatpush1.msra.mxu0 0.0
        %999 = vmatprep.subr.mxu0 0.0
        %1000 = vmatpush1.msra.mxu0 0.0
        %1001 = vmatprep.subr.mxu0 0.0
        %1002 = vmatpush1.msra.mxu0 0.0
        %1003 = vmatprep.subr.mxu0 0.0
        %1004 = vmatpush1.msra.mxu0 0.0
        %1005 = vmatprep.subr.mxu0 0.0
        %1006 = vmatpush1.msra.mxu0 0.0
        %1007 = vmatprep.subr.mxu0 0.0
        %1008 = vmatpush1.msra.mxu0 0.0
        %1009 = vmatprep.subr.mxu0 0.0
        %1010 = vmatpush1.msra.mxu0 0.0
        %1011 = vmatprep.subr.mxu0 0.0
        %1012 = vmatpush1.msra.mxu0 0.0
        %1013 = vmatprep.subr.mxu0 0.0
        %1014 = vmatpush1.msra.mxu0 %v727
        %1015 = vmatprep.subr.mxu0 0.0
        %1016 = vmatpush1.msra.mxu0 %v726
        %1017 = vmatprep.subr.mxu0 0.0
        %1018 = vmatpush1.msra.mxu0 %v725
        %1019 = vmatprep.subr.mxu0 0.0
        %1020 = vmatpush1.msra.mxu0 %v724
        %1021 = vmatprep.subr.mxu0 0.0
        %1022 = vmatpush2.msra.mxu0 0.0
        %1023 = vmatprep.subr.mxu0 0.0
        %1024 = vmatpush2.msra.mxu0 0.0
        %1025 = vmatprep.subr.mxu0 0.0
        %1026 = vmatpush2.msra.mxu0 0.0
        %1027 = vmatprep.subr.mxu0 0.0
        %1028 = vmatpush2.msra.mxu0 0.0
        %1029 = vmatprep.subr.mxu0 0.0
        %1030 = vmatpush2.msra.mxu0 0.0
        %1031 = vmatprep.subr.mxu0 0.0
        %1032 = vmatpush2.msra.mxu0 0.0
        %1033 = vmatprep.subr.mxu0 0.0
        %1034 = vmatpush2.msra.mxu0 0.0
        %1035 = vmatprep.subr.mxu0 0.0
        %1036 = vmatpush2.msra.mxu0 0.0
        %1037 = vmatprep.subr.mxu0 0.0
        %1038 = vmatpush2.msra.mxu0 0.0
        %1039 = vmatprep.subr.mxu0 0.0
        %1040 = vmatpush2.msra.mxu0 0.0
        %1041 = vmatprep.subr.mxu0 0.0
        %1042 = vmatpush2.msra.mxu0 0.0
        %1043 = vmatprep.subr.mxu0 0.0
        %1044 = vmatpush2.msra.mxu0 0.0
        %1045 = vmatprep.subr.mxu0 0.0
        %1046 = vmatpush2.msra.mxu0 0.0
        %1047 = vmatprep.subr.mxu0 0.0
        %1048 = vmatpush2.msra.mxu0 0.0
        %1049 = vmatprep.subr.mxu0 0.0
        %1050 = vmatpush2.msra.mxu0 0.0
        %1051 = vmatprep.subr.mxu0 0.0
        %1052 = vmatpush2.msra.mxu0 0.0
        %1053 = vmatprep.mubr.f32.mxu0 0.0
        %1054 = vmatmul.mubr.f32.gmra.mxu0 %v987
        %v1055 = vpop.f32.mrf.mxu0
        %v1056 = vadd.f32 %v984, %v1055
        %v1057 = vpop.f32.mrf.mxu0
        %1058 = vdwg.mxu0
        %1060 = vset.pattern.permute.xlu0 0
        %1061 = vperm.xlu0 %1060, %v711
        %v1062 = vpop.permute.xlu0 %1061
        %v1064 = vmul.f32 %v1056, %v1062
        %v1065 = vadd.f32 %v1064, 0.0
        %s1066 = scalar_lea.vmem %s688, 8
        %v1067 = vld [vmem:[%s1066] sm:$0xff]
        %v1069 = vsel %vm810, %v1067, 0
        %1071 = vmatprep.subr.mxu0 0.0
        %1072 = vmatpush1.msra.mxu0 0.0
        %1073 = vmatprep.subr.mxu0 0.0
        %1074 = vmatpush1.msra.mxu0 0.0
        %1075 = vmatprep.subr.mxu0 0.0
        %1076 = vmatpush1.msra.mxu0 0.0
        %1077 = vmatprep.subr.mxu0 0.0
        %1078 = vmatpush1.msra.mxu0 0.0
        %1079 = vmatprep.subr.mxu0 0.0
        %1080 = vmatpush1.msra.mxu0 0.0
        %1081 = vmatprep.subr.mxu0 0.0
        %1082 = vmatpush1.msra.mxu0 0.0
        %1083 = vmatprep.subr.mxu0 0.0
        %1084 = vmatpush1.msra.mxu0 0.0
        %1085 = vmatprep.subr.mxu0 0.0
        %1086 = vmatpush1.msra.mxu0 0.0
        %1087 = vmatprep.subr.mxu0 0.0
        %1088 = vmatpush1.msra.mxu0 %v719
        %1089 = vmatprep.subr.mxu0 0.0
        %1090 = vmatpush1.msra.mxu0 %v718
        %1091 = vmatprep.subr.mxu0 0.0
        %1092 = vmatpush1.msra.mxu0 %v717
        %1093 = vmatprep.subr.mxu0 0.0
        %1094 = vmatpush1.msra.mxu0 %v716
        %1095 = vmatprep.subr.mxu0 0.0
        %1096 = vmatpush1.msra.mxu0 %v715
        %1097 = vmatprep.subr.mxu0 0.0
        %1098 = vmatpush1.msra.mxu0 %v714
        %1099 = vmatprep.subr.mxu0 0.0
        %1100 = vmatpush1.msra.mxu0 %v713
        %1101 = vmatprep.subr.mxu0 0.0
        %1102 = vmatpush1.msra.mxu0 %v712
        %1103 = vmatprep.subr.mxu0 0.0
        %1104 = vmatpush2.msra.mxu0 0.0
        %1105 = vmatprep.subr.mxu0 0.0
        %1106 = vmatpush2.msra.mxu0 0.0
        %1107 = vmatprep.subr.mxu0 0.0
        %1108 = vmatpush2.msra.mxu0 0.0
        %1109 = vmatprep.subr.mxu0 0.0
        %1110 = vmatpush2.msra.mxu0 0.0
        %1111 = vmatprep.subr.mxu0 0.0
        %1112 = vmatpush2.msra.mxu0 0.0
        %1113 = vmatprep.subr.mxu0 0.0
        %1114 = vmatpush2.msra.mxu0 0.0
        %1115 = vmatprep.subr.mxu0 0.0
        %1116 = vmatpush2.msra.mxu0 0.0
        %1117 = vmatprep.subr.mxu0 0.0
        %1118 = vmatpush2.msra.mxu0 0.0
        %1119 = vmatprep.subr.mxu0 0.0
        %1120 = vmatpush2.msra.mxu0 0.0
        %1121 = vmatprep.subr.mxu0 0.0
        %1122 = vmatpush2.msra.mxu0 0.0
        %1123 = vmatprep.subr.mxu0 0.0
        %1124 = vmatpush2.msra.mxu0 0.0
        %1125 = vmatprep.subr.mxu0 0.0
        %1126 = vmatpush2.msra.mxu0 0.0
        %1127 = vmatprep.subr.mxu0 0.0
        %1128 = vmatpush2.msra.mxu0 0.0
        %1129 = vmatprep.subr.mxu0 0.0
        %1130 = vmatpush2.msra.mxu0 0.0
        %1131 = vmatprep.subr.mxu0 0.0
        %1132 = vmatpush2.msra.mxu0 0.0
        %1133 = vmatprep.subr.mxu0 0.0
        %1134 = vmatpush2.msra.mxu0 0.0
        %1135 = vmatprep.mubr.f32.mxu0 0.0
        %1136 = vmatmul.mubr.f32.gmra.mxu0 %v1069
        %v1137 = vpop.f32.mrf.mxu0
        %v1138 = vadd.f32 %v806, %v1137
        %v1139 = vpop.f32.mrf.mxu0
        %1140 = vdwg.mxu0
        %v1141 = vadd.f32 %v1138, %v888
        %v1142 = vmul.f32 %v1141, 0.5
        %v1143 = vmul.f32 %v1141, 0.70710677
        %v1144 = verf.f32.pop %v1143
        %v1145 = vadd.f32 %v1144, 1.0
        %v1146 = vmul.f32 %v1142, %v1145
        %v1148 = vsel %vm735, %v1146, 0
        %1150 = vmatprep.subr.mxu0 0.0
        %1151 = vmatpush1.msra.mxu0 0.0
        %1152 = vmatprep.subr.mxu0 0.0
        %1153 = vmatpush1.msra.mxu0 0.0
        %1154 = vmatprep.subr.mxu0 0.0
        %1155 = vmatpush1.msra.mxu0 0.0
        %1156 = vmatprep.subr.mxu0 0.0
        %1157 = vmatpush1.msra.mxu0 0.0
        %1158 = vmatprep.subr.mxu0 0.0
        %1159 = vmatpush1.msra.mxu0 0.0
        %1160 = vmatprep.subr.mxu0 0.0
        %1161 = vmatpush1.msra.mxu0 0.0
        %1162 = vmatprep.subr.mxu0 0.0
        %1163 = vmatpush1.msra.mxu0 0.0
        %1164 = vmatprep.subr.mxu0 0.0
        %1165 = vmatpush1.msra.mxu0 0.0
        %1166 = vmatprep.subr.mxu0 0.0
        %1167 = vmatpush1.msra.mxu0 0.0
        %1168 = vmatprep.subr.mxu0 0.0
        %1169 = vmatpush1.msra.mxu0 0.0
        %1170 = vmatprep.subr.mxu0 0.0
        %1171 = vmatpush1.msra.mxu0 0.0
        %1172 = vmatprep.subr.mxu0 0.0
        %1173 = vmatpush1.msra.mxu0 0.0
        %1174 = vmatprep.subr.mxu0 0.0
        %1175 = vmatpush1.msra.mxu0 %v723
        %1176 = vmatprep.subr.mxu0 0.0
        %1177 = vmatpush1.msra.mxu0 %v722
        %1178 = vmatprep.subr.mxu0 0.0
        %1179 = vmatpush1.msra.mxu0 %v721
        %1180 = vmatprep.subr.mxu0 0.0
        %1181 = vmatpush1.msra.mxu0 %v720
        %1182 = vmatprep.subr.mxu0 0.0
        %1183 = vmatpush2.msra.mxu0 0.0
        %1184 = vmatprep.subr.mxu0 0.0
        %1185 = vmatpush2.msra.mxu0 0.0
        %1186 = vmatprep.subr.mxu0 0.0
        %1187 = vmatpush2.msra.mxu0 0.0
        %1188 = vmatprep.subr.mxu0 0.0
        %1189 = vmatpush2.msra.mxu0 0.0
        %1190 = vmatprep.subr.mxu0 0.0
        %1191 = vmatpush2.msra.mxu0 0.0
        %1192 = vmatprep.subr.mxu0 0.0
        %1193 = vmatpush2.msra.mxu0 0.0
        %1194 = vmatprep.subr.mxu0 0.0
        %1195 = vmatpush2.msra.mxu0 0.0
        %1196 = vmatprep.subr.mxu0 0.0
        %1197 = vmatpush2.msra.mxu0 0.0
        %1198 = vmatprep.subr.mxu0 0.0
        %1199 = vmatpush2.msra.mxu0 0.0
        %1200 = vmatprep.subr.mxu0 0.0
        %1201 = vmatpush2.msra.mxu0 0.0
        %1202 = vmatprep.subr.mxu0 0.0
        %1203 = vmatpush2.msra.mxu0 0.0
        %1204 = vmatprep.subr.mxu0 0.0
        %1205 = vmatpush2.msra.mxu0 0.0
        %1206 = vmatprep.subr.mxu0 0.0
        %1207 = vmatpush2.msra.mxu0 0.0
        %1208 = vmatprep.subr.mxu0 0.0
        %1209 = vmatpush2.msra.mxu0 0.0
        %1210 = vmatprep.subr.mxu0 0.0
        %1211 = vmatpush2.msra.mxu0 0.0
        %1212 = vmatprep.subr.mxu0 0.0
        %1213 = vmatpush2.msra.mxu0 0.0
        %1214 = vmatprep.mubr.f32.mxu0 0.0
        %1215 = vmatmul.mubr.f32.gmra.mxu0 %v1148
        %v1216 = vpop.f32.mrf.mxu0
        %v1217 = vadd.f32 %v900, %v1216
        %v1218 = vpop.f32.mrf.mxu0
        %1219 = vdwg.mxu0
        %v1220 = vmul.f32 %v1217, 0.5
        %v1221 = vmul.f32 %v1217, 0.70710677
        %v1222 = verf.f32.pop %v1221
        %v1223 = vadd.f32 %v1222, 1.0
        %v1224 = vmul.f32 %v1220, %v1223
        %v1226 = vsel %vm735, %v1224, 0
        %1228 = vmatprep.subr.mxu0 0.0
        %1229 = vmatpush1.msra.mxu0 0.0
        %1230 = vmatprep.subr.mxu0 0.0
        %1231 = vmatpush1.msra.mxu0 0.0
        %1232 = vmatprep.subr.mxu0 0.0
        %1233 = vmatpush1.msra.mxu0 0.0
        %1234 = vmatprep.subr.mxu0 0.0
        %1235 = vmatpush1.msra.mxu0 0.0
        %1236 = vmatprep.subr.mxu0 0.0
        %1237 = vmatpush1.msra.mxu0 0.0
        %1238 = vmatprep.subr.mxu0 0.0
        %1239 = vmatpush1.msra.mxu0 0.0
        %1240 = vmatprep.subr.mxu0 0.0
        %1241 = vmatpush1.msra.mxu0 0.0
        %1242 = vmatprep.subr.mxu0 0.0
        %1243 = vmatpush1.msra.mxu0 0.0
        %1244 = vmatprep.subr.mxu0 0.0
        %1245 = vmatpush1.msra.mxu0 0.0
        %1246 = vmatprep.subr.mxu0 0.0
        %1247 = vmatpush1.msra.mxu0 0.0
        %1248 = vmatprep.subr.mxu0 0.0
        %1249 = vmatpush1.msra.mxu0 0.0
        %1250 = vmatprep.subr.mxu0 0.0
        %1251 = vmatpush1.msra.mxu0 0.0
        %1252 = vmatprep.subr.mxu0 0.0
        %1253 = vmatpush1.msra.mxu0 %v727
        %1254 = vmatprep.subr.mxu0 0.0
        %1255 = vmatpush1.msra.mxu0 %v726
        %1256 = vmatprep.subr.mxu0 0.0
        %1257 = vmatpush1.msra.mxu0 %v725
        %1258 = vmatprep.subr.mxu0 0.0
        %1259 = vmatpush1.msra.mxu0 %v724
        %1260 = vmatprep.subr.mxu0 0.0
        %1261 = vmatpush2.msra.mxu0 0.0
        %1262 = vmatprep.subr.mxu0 0.0
        %1263 = vmatpush2.msra.mxu0 0.0
        %1264 = vmatprep.subr.mxu0 0.0
        %1265 = vmatpush2.msra.mxu0 0.0
        %1266 = vmatprep.subr.mxu0 0.0
        %1267 = vmatpush2.msra.mxu0 0.0
        %1268 = vmatprep.subr.mxu0 0.0
        %1269 = vmatpush2.msra.mxu0 0.0
        %1270 = vmatprep.subr.mxu0 0.0
        %1271 = vmatpush2.msra.mxu0 0.0
        %1272 = vmatprep.subr.mxu0 0.0
        %1273 = vmatpush2.msra.mxu0 0.0
        %1274 = vmatprep.subr.mxu0 0.0
        %1275 = vmatpush2.msra.mxu0 0.0
        %1276 = vmatprep.subr.mxu0 0.0
        %1277 = vmatpush2.msra.mxu0 0.0
        %1278 = vmatprep.subr.mxu0 0.0
        %1279 = vmatpush2.msra.mxu0 0.0
        %1280 = vmatprep.subr.mxu0 0.0
        %1281 = vmatpush2.msra.mxu0 0.0
        %1282 = vmatprep.subr.mxu0 0.0
        %1283 = vmatpush2.msra.mxu0 0.0
        %1284 = vmatprep.subr.mxu0 0.0
        %1285 = vmatpush2.msra.mxu0 0.0
        %1286 = vmatprep.subr.mxu0 0.0
        %1287 = vmatpush2.msra.mxu0 0.0
        %1288 = vmatprep.subr.mxu0 0.0
        %1289 = vmatpush2.msra.mxu0 0.0
        %1290 = vmatprep.subr.mxu0 0.0
        %1291 = vmatpush2.msra.mxu0 0.0
        %1292 = vmatprep.mubr.f32.mxu0 0.0
        %1293 = vmatmul.mubr.f32.gmra.mxu0 %v1226
        %v1294 = vpop.f32.mrf.mxu0
        %v1295 = vadd.f32 %v984, %v1294
        %v1296 = vpop.f32.mrf.mxu0
        %1297 = vdwg.mxu0
        %1298 = vset.pattern.permute.xlu0 1
        %1299 = vperm.xlu0 %1298, %v711
        %v1300 = vpop.permute.xlu0 %1299
        %v1302 = vmul.f32 %v1295, %v1300
        %v1303 = vadd.f32 %v1065, %v1302
        %s1304 = scalar_lea.vmem %s688, 16
        %v1305 = vld [vmem:[%s1304] sm:$0xff]
        %v1307 = vsel %vm810, %v1305, 0
        %1309 = vmatprep.subr.mxu0 0.0
        %1310 = vmatpush1.msra.mxu0 0.0
        %1311 = vmatprep.subr.mxu0 0.0
        %1312 = vmatpush1.msra.mxu0 0.0
        %1313 = vmatprep.subr.mxu0 0.0
        %1314 = vmatpush1.msra.mxu0 0.0
        %1315 = vmatprep.subr.mxu0 0.0
        %1316 = vmatpush1.msra.mxu0 0.0
        %1317 = vmatprep.subr.mxu0 0.0
        %1318 = vmatpush1.msra.mxu0 0.0
        %1319 = vmatprep.subr.mxu0 0.0
        %1320 = vmatpush1.msra.mxu0 0.0
        %1321 = vmatprep.subr.mxu0 0.0
        %1322 = vmatpush1.msra.mxu0 0.0
        %1323 = vmatprep.subr.mxu0 0.0
        %1324 = vmatpush1.msra.mxu0 0.0
        %1325 = vmatprep.subr.mxu0 0.0
        %1326 = vmatpush1.msra.mxu0 %v719
        %1327 = vmatprep.subr.mxu0 0.0
        %1328 = vmatpush1.msra.mxu0 %v718
        %1329 = vmatprep.subr.mxu0 0.0
        %1330 = vmatpush1.msra.mxu0 %v717
        %1331 = vmatprep.subr.mxu0 0.0
        %1332 = vmatpush1.msra.mxu0 %v716
        %1333 = vmatprep.subr.mxu0 0.0
        %1334 = vmatpush1.msra.mxu0 %v715
        %1335 = vmatprep.subr.mxu0 0.0
        %1336 = vmatpush1.msra.mxu0 %v714
        %1337 = vmatprep.subr.mxu0 0.0
        %1338 = vmatpush1.msra.mxu0 %v713
        %1339 = vmatprep.subr.mxu0 0.0
        %1340 = vmatpush1.msra.mxu0 %v712
        %1341 = vmatprep.subr.mxu0 0.0
        %1342 = vmatpush2.msra.mxu0 0.0
        %1343 = vmatprep.subr.mxu0 0.0
        %1344 = vmatpush2.msra.mxu0 0.0
        %1345 = vmatprep.subr.mxu0 0.0
        %1346 = vmatpush2.msra.mxu0 0.0
        %1347 = vmatprep.subr.mxu0 0.0
        %1348 = vmatpush2.msra.mxu0 0.0
        %1349 = vmatprep.subr.mxu0 0.0
        %1350 = vmatpush2.msra.mxu0 0.0
        %1351 = vmatprep.subr.mxu0 0.0
        %1352 = vmatpush2.msra.mxu0 0.0
        %1353 = vmatprep.subr.mxu0 0.0
        %1354 = vmatpush2.msra.mxu0 0.0
        %1355 = vmatprep.subr.mxu0 0.0
        %1356 = vmatpush2.msra.mxu0 0.0
        %1357 = vmatprep.subr.mxu0 0.0
        %1358 = vmatpush2.msra.mxu0 0.0
        %1359 = vmatprep.subr.mxu0 0.0
        %1360 = vmatpush2.msra.mxu0 0.0
        %1361 = vmatprep.subr.mxu0 0.0
        %1362 = vmatpush2.msra.mxu0 0.0
        %1363 = vmatprep.subr.mxu0 0.0
        %1364 = vmatpush2.msra.mxu0 0.0
        %1365 = vmatprep.subr.mxu0 0.0
        %1366 = vmatpush2.msra.mxu0 0.0
        %1367 = vmatprep.subr.mxu0 0.0
        %1368 = vmatpush2.msra.mxu0 0.0
        %1369 = vmatprep.subr.mxu0 0.0
        %1370 = vmatpush2.msra.mxu0 0.0
        %1371 = vmatprep.subr.mxu0 0.0
        %1372 = vmatpush2.msra.mxu0 0.0
        %1373 = vmatprep.mubr.f32.mxu0 0.0
        %1374 = vmatmul.mubr.f32.gmra.mxu0 %v1307
        %v1375 = vpop.f32.mrf.mxu0
        %v1376 = vadd.f32 %v806, %v1375
        %v1377 = vpop.f32.mrf.mxu0
        %1378 = vdwg.mxu0
        %v1379 = vadd.f32 %v1376, %v888
        %v1380 = vmul.f32 %v1379, 0.5
        %v1381 = vmul.f32 %v1379, 0.70710677
        %v1382 = verf.f32.pop %v1381
        %v1383 = vadd.f32 %v1382, 1.0
        %v1384 = vmul.f32 %v1380, %v1383
        %v1386 = vsel %vm735, %v1384, 0
        %1388 = vmatprep.subr.mxu0 0.0
        %1389 = vmatpush1.msra.mxu0 0.0
        %1390 = vmatprep.subr.mxu0 0.0
        %1391 = vmatpush1.msra.mxu0 0.0
        %1392 = vmatprep.subr.mxu0 0.0
        %1393 = vmatpush1.msra.mxu0 0.0
        %1394 = vmatprep.subr.mxu0 0.0
        %1395 = vmatpush1.msra.mxu0 0.0
        %1396 = vmatprep.subr.mxu0 0.0
        %1397 = vmatpush1.msra.mxu0 0.0
        %1398 = vmatprep.subr.mxu0 0.0
        %1399 = vmatpush1.msra.mxu0 0.0
        %1400 = vmatprep.subr.mxu0 0.0
        %1401 = vmatpush1.msra.mxu0 0.0
        %1402 = vmatprep.subr.mxu0 0.0
        %1403 = vmatpush1.msra.mxu0 0.0
        %1404 = vmatprep.subr.mxu0 0.0
        %1405 = vmatpush1.msra.mxu0 0.0
        %1406 = vmatprep.subr.mxu0 0.0
        %1407 = vmatpush1.msra.mxu0 0.0
        %1408 = vmatprep.subr.mxu0 0.0
        %1409 = vmatpush1.msra.mxu0 0.0
        %1410 = vmatprep.subr.mxu0 0.0
        %1411 = vmatpush1.msra.mxu0 0.0
        %1412 = vmatprep.subr.mxu0 0.0
        %1413 = vmatpush1.msra.mxu0 %v723
        %1414 = vmatprep.subr.mxu0 0.0
        %1415 = vmatpush1.msra.mxu0 %v722
        %1416 = vmatprep.subr.mxu0 0.0
        %1417 = vmatpush1.msra.mxu0 %v721
        %1418 = vmatprep.subr.mxu0 0.0
        %1419 = vmatpush1.msra.mxu0 %v720
        %1420 = vmatprep.subr.mxu0 0.0
        %1421 = vmatpush2.msra.mxu0 0.0
        %1422 = vmatprep.subr.mxu0 0.0
        %1423 = vmatpush2.msra.mxu0 0.0
        %1424 = vmatprep.subr.mxu0 0.0
        %1425 = vmatpush2.msra.mxu0 0.0
        %1426 = vmatprep.subr.mxu0 0.0
        %1427 = vmatpush2.msra.mxu0 0.0
        %1428 = vmatprep.subr.mxu0 0.0
        %1429 = vmatpush2.msra.mxu0 0.0
        %1430 = vmatprep.subr.mxu0 0.0
        %1431 = vmatpush2.msra.mxu0 0.0
        %1432 = vmatprep.subr.mxu0 0.0
        %1433 = vmatpush2.msra.mxu0 0.0
        %1434 = vmatprep.subr.mxu0 0.0
        %1435 = vmatpush2.msra.mxu0 0.0
        %1436 = vmatprep.subr.mxu0 0.0
        %1437 = vmatpush2.msra.mxu0 0.0
        %1438 = vmatprep.subr.mxu0 0.0
        %1439 = vmatpush2.msra.mxu0 0.0
        %1440 = vmatprep.subr.mxu0 0.0
        %1441 = vmatpush2.msra.mxu0 0.0
        %1442 = vmatprep.subr.mxu0 0.0
        %1443 = vmatpush2.msra.mxu0 0.0
        %1444 = vmatprep.subr.mxu0 0.0
        %1445 = vmatpush2.msra.mxu0 0.0
        %1446 = vmatprep.subr.mxu0 0.0
        %1447 = vmatpush2.msra.mxu0 0.0
        %1448 = vmatprep.subr.mxu0 0.0
        %1449 = vmatpush2.msra.mxu0 0.0
        %1450 = vmatprep.subr.mxu0 0.0
        %1451 = vmatpush2.msra.mxu0 0.0
        %1452 = vmatprep.mubr.f32.mxu0 0.0
        %1453 = vmatmul.mubr.f32.gmra.mxu0 %v1386
        %v1454 = vpop.f32.mrf.mxu0
        %v1455 = vadd.f32 %v900, %v1454
        %v1456 = vpop.f32.mrf.mxu0
        %1457 = vdwg.mxu0
        %v1458 = vmul.f32 %v1455, 0.5
        %v1459 = vmul.f32 %v1455, 0.70710677
        %v1460 = verf.f32.pop %v1459
        %v1461 = vadd.f32 %v1460, 1.0
        %v1462 = vmul.f32 %v1458, %v1461
        %v1464 = vsel %vm735, %v1462, 0
        %1466 = vmatprep.subr.mxu0 0.0
        %1467 = vmatpush1.msra.mxu0 0.0
        %1468 = vmatprep.subr.mxu0 0.0
        %1469 = vmatpush1.msra.mxu0 0.0
        %1470 = vmatprep.subr.mxu0 0.0
        %1471 = vmatpush1.msra.mxu0 0.0
        %1472 = vmatprep.subr.mxu0 0.0
        %1473 = vmatpush1.msra.mxu0 0.0
        %1474 = vmatprep.subr.mxu0 0.0
        %1475 = vmatpush1.msra.mxu0 0.0
        %1476 = vmatprep.subr.mxu0 0.0
        %1477 = vmatpush1.msra.mxu0 0.0
        %1478 = vmatprep.subr.mxu0 0.0
        %1479 = vmatpush1.msra.mxu0 0.0
        %1480 = vmatprep.subr.mxu0 0.0
        %1481 = vmatpush1.msra.mxu0 0.0
        %1482 = vmatprep.subr.mxu0 0.0
        %1483 = vmatpush1.msra.mxu0 0.0
        %1484 = vmatprep.subr.mxu0 0.0
        %1485 = vmatpush1.msra.mxu0 0.0
        %1486 = vmatprep.subr.mxu0 0.0
        %1487 = vmatpush1.msra.mxu0 0.0
        %1488 = vmatprep.subr.mxu0 0.0
        %1489 = vmatpush1.msra.mxu0 0.0
        %1490 = vmatprep.subr.mxu0 0.0
        %1491 = vmatpush1.msra.mxu0 %v727
        %1492 = vmatprep.subr.mxu0 0.0
        %1493 = vmatpush1.msra.mxu0 %v726
        %1494 = vmatprep.subr.mxu0 0.0
        %1495 = vmatpush1.msra.mxu0 %v725
        %1496 = vmatprep.subr.mxu0 0.0
        %1497 = vmatpush1.msra.mxu0 %v724
        %1498 = vmatprep.subr.mxu0 0.0
        %1499 = vmatpush2.msra.mxu0 0.0
        %1500 = vmatprep.subr.mxu0 0.0
        %1501 = vmatpush2.msra.mxu0 0.0
        %1502 = vmatprep.subr.mxu0 0.0
        %1503 = vmatpush2.msra.mxu0 0.0
        %1504 = vmatprep.subr.mxu0 0.0
        %1505 = vmatpush2.msra.mxu0 0.0
        %1506 = vmatprep.subr.mxu0 0.0
        %1507 = vmatpush2.msra.mxu0 0.0
        %1508 = vmatprep.subr.mxu0 0.0
        %1509 = vmatpush2.msra.mxu0 0.0
        %1510 = vmatprep.subr.mxu0 0.0
        %1511 = vmatpush2.msra.mxu0 0.0
        %1512 = vmatprep.subr.mxu0 0.0
        %1513 = vmatpush2.msra.mxu0 0.0
        %1514 = vmatprep.subr.mxu0 0.0
        %1515 = vmatpush2.msra.mxu0 0.0
        %1516 = vmatprep.subr.mxu0 0.0
        %1517 = vmatpush2.msra.mxu0 0.0
        %1518 = vmatprep.subr.mxu0 0.0
        %1519 = vmatpush2.msra.mxu0 0.0
        %1520 = vmatprep.subr.mxu0 0.0
        %1521 = vmatpush2.msra.mxu0 0.0
        %1522 = vmatprep.subr.mxu0 0.0
        %1523 = vmatpush2.msra.mxu0 0.0
        %1524 = vmatprep.subr.mxu0 0.0
        %1525 = vmatpush2.msra.mxu0 0.0
        %1526 = vmatprep.subr.mxu0 0.0
        %1527 = vmatpush2.msra.mxu0 0.0
        %1528 = vmatprep.subr.mxu0 0.0
        %1529 = vmatpush2.msra.mxu0 0.0
        %1530 = vmatprep.mubr.f32.mxu0 0.0
        %1531 = vmatmul.mubr.f32.gmra.mxu0 %v1464
        %v1532 = vpop.f32.mrf.mxu0
        %v1533 = vadd.f32 %v984, %v1532
        %v1534 = vpop.f32.mrf.mxu0
        %1535 = vdwg.mxu0
        %1536 = vset.pattern.permute.xlu0 2
        %1537 = vperm.xlu0 %1536, %v711
        %v1538 = vpop.permute.xlu0 %1537
        %v1540 = vmul.f32 %v1533, %v1538
        %v1541 = vadd.f32 %v1303, %v1540
        %s1542 = scalar_lea.vmem %s688, 24
        %v1543 = vld [vmem:[%s1542] sm:$0xff]
        %v1545 = vsel %vm810, %v1543, 0
        %1547 = vmatprep.subr.mxu0 0.0
        %1548 = vmatpush1.msra.mxu0 0.0
        %1549 = vmatprep.subr.mxu0 0.0
        %1550 = vmatpush1.msra.mxu0 0.0
        %1551 = vmatprep.subr.mxu0 0.0
        %1552 = vmatpush1.msra.mxu0 0.0
        %1553 = vmatprep.subr.mxu0 0.0
        %1554 = vmatpush1.msra.mxu0 0.0
        %1555 = vmatprep.subr.mxu0 0.0
        %1556 = vmatpush1.msra.mxu0 0.0
        %1557 = vmatprep.subr.mxu0 0.0
        %1558 = vmatpush1.msra.mxu0 0.0
        %1559 = vmatprep.subr.mxu0 0.0
        %1560 = vmatpush1.msra.mxu0 0.0
        %1561 = vmatprep.subr.mxu0 0.0
        %1562 = vmatpush1.msra.mxu0 0.0
        %1563 = vmatprep.subr.mxu0 0.0
        %1564 = vmatpush1.msra.mxu0 %v719
        %1565 = vmatprep.subr.mxu0 0.0
        %1566 = vmatpush1.msra.mxu0 %v718
        %1567 = vmatprep.subr.mxu0 0.0
        %1568 = vmatpush1.msra.mxu0 %v717
        %1569 = vmatprep.subr.mxu0 0.0
        %1570 = vmatpush1.msra.mxu0 %v716
        %1571 = vmatprep.subr.mxu0 0.0
        %1572 = vmatpush1.msra.mxu0 %v715
        %1573 = vmatprep.subr.mxu0 0.0
        %1574 = vmatpush1.msra.mxu0 %v714
        %1575 = vmatprep.subr.mxu0 0.0
        %1576 = vmatpush1.msra.mxu0 %v713
        %1577 = vmatprep.subr.mxu0 0.0
        %1578 = vmatpush1.msra.mxu0 %v712
        %1579 = vmatprep.subr.mxu0 0.0
        %1580 = vmatpush2.msra.mxu0 0.0
        %1581 = vmatprep.subr.mxu0 0.0
        %1582 = vmatpush2.msra.mxu0 0.0
        %1583 = vmatprep.subr.mxu0 0.0
        %1584 = vmatpush2.msra.mxu0 0.0
        %1585 = vmatprep.subr.mxu0 0.0
        %1586 = vmatpush2.msra.mxu0 0.0
        %1587 = vmatprep.subr.mxu0 0.0
        %1588 = vmatpush2.msra.mxu0 0.0
        %1589 = vmatprep.subr.mxu0 0.0
        %1590 = vmatpush2.msra.mxu0 0.0
        %1591 = vmatprep.subr.mxu0 0.0
        %1592 = vmatpush2.msra.mxu0 0.0
        %1593 = vmatprep.subr.mxu0 0.0
        %1594 = vmatpush2.msra.mxu0 0.0
        %1595 = vmatprep.subr.mxu0 0.0
        %1596 = vmatpush2.msra.mxu0 0.0
        %1597 = vmatprep.subr.mxu0 0.0
        %1598 = vmatpush2.msra.mxu0 0.0
        %1599 = vmatprep.subr.mxu0 0.0
        %1600 = vmatpush2.msra.mxu0 0.0
        %1601 = vmatprep.subr.mxu0 0.0
        %1602 = vmatpush2.msra.mxu0 0.0
        %1603 = vmatprep.subr.mxu0 0.0
        %1604 = vmatpush2.msra.mxu0 0.0
        %1605 = vmatprep.subr.mxu0 0.0
        %1606 = vmatpush2.msra.mxu0 0.0
        %1607 = vmatprep.subr.mxu0 0.0
        %1608 = vmatpush2.msra.mxu0 0.0
        %1609 = vmatprep.subr.mxu0 0.0
        %1610 = vmatpush2.msra.mxu0 0.0
        %1611 = vmatprep.mubr.f32.mxu0 0.0
        %1612 = vmatmul.mubr.f32.gmra.mxu0 %v1545
        %v1613 = vpop.f32.mrf.mxu0
        %v1614 = vadd.f32 %v806, %v1613
        %v1615 = vpop.f32.mrf.mxu0
        %1616 = vdwg.mxu0
        %v1617 = vadd.f32 %v1614, %v888
        %v1618 = vmul.f32 %v1617, 0.5
        %v1619 = vmul.f32 %v1617, 0.70710677
        %v1620 = verf.f32.pop %v1619
        %v1621 = vadd.f32 %v1620, 1.0
        %v1622 = vmul.f32 %v1618, %v1621
        %v1624 = vsel %vm735, %v1622, 0
        %1626 = vmatprep.subr.mxu0 0.0
        %1627 = vmatpush1.msra.mxu0 0.0
        %1628 = vmatprep.subr.mxu0 0.0
        %1629 = vmatpush1.msra.mxu0 0.0
        %1630 = vmatprep.subr.mxu0 0.0
        %1631 = vmatpush1.msra.mxu0 0.0
        %1632 = vmatprep.subr.mxu0 0.0
        %1633 = vmatpush1.msra.mxu0 0.0
        %1634 = vmatprep.subr.mxu0 0.0
        %1635 = vmatpush1.msra.mxu0 0.0
        %1636 = vmatprep.subr.mxu0 0.0
        %1637 = vmatpush1.msra.mxu0 0.0
        %1638 = vmatprep.subr.mxu0 0.0
        %1639 = vmatpush1.msra.mxu0 0.0
        %1640 = vmatprep.subr.mxu0 0.0
        %1641 = vmatpush1.msra.mxu0 0.0
        %1642 = vmatprep.subr.mxu0 0.0
        %1643 = vmatpush1.msra.mxu0 0.0
        %1644 = vmatprep.subr.mxu0 0.0
        %1645 = vmatpush1.msra.mxu0 0.0
        %1646 = vmatprep.subr.mxu0 0.0
        %1647 = vmatpush1.msra.mxu0 0.0
        %1648 = vmatprep.subr.mxu0 0.0
        %1649 = vmatpush1.msra.mxu0 0.0
        %1650 = vmatprep.subr.mxu0 0.0
        %1651 = vmatpush1.msra.mxu0 %v723
        %1652 = vmatprep.subr.mxu0 0.0
        %1653 = vmatpush1.msra.mxu0 %v722
        %1654 = vmatprep.subr.mxu0 0.0
        %1655 = vmatpush1.msra.mxu0 %v721
        %1656 = vmatprep.subr.mxu0 0.0
        %1657 = vmatpush1.msra.mxu0 %v720
        %1658 = vmatprep.subr.mxu0 0.0
        %1659 = vmatpush2.msra.mxu0 0.0
        %1660 = vmatprep.subr.mxu0 0.0
        %1661 = vmatpush2.msra.mxu0 0.0
        %1662 = vmatprep.subr.mxu0 0.0
        %1663 = vmatpush2.msra.mxu0 0.0
        %1664 = vmatprep.subr.mxu0 0.0
        %1665 = vmatpush2.msra.mxu0 0.0
        %1666 = vmatprep.subr.mxu0 0.0
        %1667 = vmatpush2.msra.mxu0 0.0
        %1668 = vmatprep.subr.mxu0 0.0
        %1669 = vmatpush2.msra.mxu0 0.0
        %1670 = vmatprep.subr.mxu0 0.0
        %1671 = vmatpush2.msra.mxu0 0.0
        %1672 = vmatprep.subr.mxu0 0.0
        %1673 = vmatpush2.msra.mxu0 0.0
        %1674 = vmatprep.subr.mxu0 0.0
        %1675 = vmatpush2.msra.mxu0 0.0
        %1676 = vmatprep.subr.mxu0 0.0
        %1677 = vmatpush2.msra.mxu0 0.0
        %1678 = vmatprep.subr.mxu0 0.0
        %1679 = vmatpush2.msra.mxu0 0.0
        %1680 = vmatprep.subr.mxu0 0.0
        %1681 = vmatpush2.msra.mxu0 0.0
        %1682 = vmatprep.subr.mxu0 0.0
        %1683 = vmatpush2.msra.mxu0 0.0
        %1684 = vmatprep.subr.mxu0 0.0
        %1685 = vmatpush2.msra.mxu0 0.0
        %1686 = vmatprep.subr.mxu0 0.0
        %1687 = vmatpush2.msra.mxu0 0.0
        %1688 = vmatprep.subr.mxu0 0.0
        %1689 = vmatpush2.msra.mxu0 0.0
        %1690 = vmatprep.mubr.f32.mxu0 0.0
        %1691 = vmatmul.mubr.f32.gmra.mxu0 %v1624
        %v1692 = vpop.f32.mrf.mxu0
        %v1693 = vadd.f32 %v900, %v1692
        %v1694 = vpop.f32.mrf.mxu0
        %1695 = vdwg.mxu0
        %v1696 = vmul.f32 %v1693, 0.5
        %v1697 = vmul.f32 %v1693, 0.70710677
        %v1698 = verf.f32.pop %v1697
        %v1699 = vadd.f32 %v1698, 1.0
        %v1700 = vmul.f32 %v1696, %v1699
        %v1702 = vsel %vm735, %v1700, 0
        %1704 = vmatprep.subr.mxu0 0.0
        %1705 = vmatpush1.msra.mxu0 0.0
        %1706 = vmatprep.subr.mxu0 0.0
        %1707 = vmatpush1.msra.mxu0 0.0
        %1708 = vmatprep.subr.mxu0 0.0
        %1709 = vmatpush1.msra.mxu0 0.0
        %1710 = vmatprep.subr.mxu0 0.0
        %1711 = vmatpush1.msra.mxu0 0.0
        %1712 = vmatprep.subr.mxu0 0.0
        %1713 = vmatpush1.msra.mxu0 0.0
        %1714 = vmatprep.subr.mxu0 0.0
        %1715 = vmatpush1.msra.mxu0 0.0
        %1716 = vmatprep.subr.mxu0 0.0
        %1717 = vmatpush1.msra.mxu0 0.0
        %1718 = vmatprep.subr.mxu0 0.0
        %1719 = vmatpush1.msra.mxu0 0.0
        %1720 = vmatprep.subr.mxu0 0.0
        %1721 = vmatpush1.msra.mxu0 0.0
        %1722 = vmatprep.subr.mxu0 0.0
        %1723 = vmatpush1.msra.mxu0 0.0
        %1724 = vmatprep.subr.mxu0 0.0
        %1725 = vmatpush1.msra.mxu0 0.0
        %1726 = vmatprep.subr.mxu0 0.0
        %1727 = vmatpush1.msra.mxu0 0.0
        %1728 = vmatprep.subr.mxu0 0.0
        %1729 = vmatpush1.msra.mxu0 %v727
        %1730 = vmatprep.subr.mxu0 0.0
        %1731 = vmatpush1.msra.mxu0 %v726
        %1732 = vmatprep.subr.mxu0 0.0
        %1733 = vmatpush1.msra.mxu0 %v725
        %1734 = vmatprep.subr.mxu0 0.0
        %1735 = vmatpush1.msra.mxu0 %v724
        %1736 = vmatprep.subr.mxu0 0.0
        %1737 = vmatpush2.msra.mxu0 0.0
        %1738 = vmatprep.subr.mxu0 0.0
        %1739 = vmatpush2.msra.mxu0 0.0
        %1740 = vmatprep.subr.mxu0 0.0
        %1741 = vmatpush2.msra.mxu0 0.0
        %1742 = vmatprep.subr.mxu0 0.0
        %1743 = vmatpush2.msra.mxu0 0.0
        %1744 = vmatprep.subr.mxu0 0.0
        %1745 = vmatpush2.msra.mxu0 0.0
        %1746 = vmatprep.subr.mxu0 0.0
        %1747 = vmatpush2.msra.mxu0 0.0
        %1748 = vmatprep.subr.mxu0 0.0
        %1749 = vmatpush2.msra.mxu0 0.0
        %1750 = vmatprep.subr.mxu0 0.0
        %1751 = vmatpush2.msra.mxu0 0.0
        %1752 = vmatprep.subr.mxu0 0.0
        %1753 = vmatpush2.msra.mxu0 0.0
        %1754 = vmatprep.subr.mxu0 0.0
        %1755 = vmatpush2.msra.mxu0 0.0
        %1756 = vmatprep.subr.mxu0 0.0
        %1757 = vmatpush2.msra.mxu0 0.0
        %1758 = vmatprep.subr.mxu0 0.0
        %1759 = vmatpush2.msra.mxu0 0.0
        %1760 = vmatprep.subr.mxu0 0.0
        %1761 = vmatpush2.msra.mxu0 0.0
        %1762 = vmatprep.subr.mxu0 0.0
        %1763 = vmatpush2.msra.mxu0 0.0
        %1764 = vmatprep.subr.mxu0 0.0
        %1765 = vmatpush2.msra.mxu0 0.0
        %1766 = vmatprep.subr.mxu0 0.0
        %1767 = vmatpush2.msra.mxu0 0.0
        %1768 = vmatprep.mubr.f32.mxu0 0.0
        %1769 = vmatmul.mubr.f32.gmra.mxu0 %v1702
        %v1770 = vpop.f32.mrf.mxu0
        %v1771 = vadd.f32 %v984, %v1770
        %v1772 = vpop.f32.mrf.mxu0
        %1773 = vdwg.mxu0
        %1774 = vset.pattern.permute.xlu0 3
        %1775 = vperm.xlu0 %1774, %v711
        %v1776 = vpop.permute.xlu0 %1775
        %v1778 = vmul.f32 %v1771, %v1776
        %v1779 = vadd.f32 %v1541, %v1778
        %v1780 = vmul.f32 %v1779, 0.033333335
        %v1781 = vadd.f32 %v710, %v1780
        %v1782 = vld [vmem:[%s11] sm:$0x1]
        %v1783 = vld [vmem:[%s12] sm:$0x1]
        %v1784 = vsel %vm735, %v1781, 0.0
        %1785 = vadd.xlane.f32.xlu0 %v1784
        %v1786 = vpop.xlane.xlu0 %1785
        %v1787 = vrcp.pop 32.0
        %v1788 = vmul.f32 %v1786, %v1787
        %v1789 = vsub.f32 %v1781, %v1788
        %v1790 = vmul.f32 %v1789, %v1789
        %v1791 = vsel %vm735, %v1790, 0.0
        %1792 = vadd.xlane.f32.xlu0 %v1791
        %v1793 = vpop.xlane.xlu0 %1792
        %v1794 = vmul.f32 %v1793, %v1787
        %v1795 = vadd.f32 %v1794, 1e-05
        %v1796 = vrsqrt.pop %v1795
        %v1797 = vmul.f32 %v1789, %v1796
        %v1799 = vlaneseq
        %v1800 = vshrl.u32 %v1799, 7
        %v1801 = vsub.s32 0, %v1800
        %v1802 = vrot.slane %v1782, %v1801
        %v1804 = vmul.f32 %v1797, %v1802
        %v1806 = vlaneseq
        %v1807 = vshrl.u32 %v1806, 7
        %v1808 = vsub.s32 0, %v1807
        %v1809 = vrot.slane %v1783, %v1808
        %v1811 = vadd.f32 %v1804, %v1809
        %v1812 = vld [vmem:[%s13] sm:$0xff]
        %v1813 = vld [vmem:[%s13 + $0x8] sm:$0xff]
        %v1814 = vld [vmem:[%s13 + $0x10] sm:$0xff]
        %v1815 = vld [vmem:[%s13 + $0x18] sm:$0xff]
        %v1816 = vld [vmem:[%s14] sm:$0x1]
        %v1818 = vlaneseq
        %v1819 = vshrl.u32 %v1818, 7
        %v1820 = vsub.s32 0, %v1819
        %v1821 = vrot.slane %v1816, %v1820
        %v1824 = vsel %vm735, %v1811, 0
        %1826 = vmatprep.subr.mxu0 0.0
        %1827 = vmatpush1.msra.mxu0 0.0
        %1828 = vmatprep.subr.mxu0 0.0
        %1829 = vmatpush1.msra.mxu0 0.0
        %1830 = vmatprep.subr.mxu0 0.0
        %1831 = vmatpush1.msra.mxu0 0.0
        %1832 = vmatprep.subr.mxu0 0.0
        %1833 = vmatpush1.msra.mxu0 0.0
        %1834 = vmatprep.subr.mxu0 0.0
        %1835 = vmatpush1.msra.mxu0 0.0
        %1836 = vmatprep.subr.mxu0 0.0
        %1837 = vmatpush1.msra.mxu0 0.0
        %1838 = vmatprep.subr.mxu0 0.0
        %1839 = vmatpush1.msra.mxu0 0.0
        %1840 = vmatprep.subr.mxu0 0.0
        %1841 = vmatpush1.msra.mxu0 0.0
        %1842 = vmatprep.subr.mxu0 0.0
        %1843 = vmatpush1.msra.mxu0 0.0
        %1844 = vmatprep.subr.mxu0 0.0
        %1845 = vmatpush1.msra.mxu0 0.0
        %1846 = vmatprep.subr.mxu0 0.0
        %1847 = vmatpush1.msra.mxu0 0.0
        %1848 = vmatprep.subr.mxu0 0.0
        %1849 = vmatpush1.msra.mxu0 0.0
        %1850 = vmatprep.subr.mxu0 0.0
        %1851 = vmatpush1.msra.mxu0 %v1815
        %1852 = vmatprep.subr.mxu0 0.0
        %1853 = vmatpush1.msra.mxu0 %v1814
        %1854 = vmatprep.subr.mxu0 0.0
        %1855 = vmatpush1.msra.mxu0 %v1813
        %1856 = vmatprep.subr.mxu0 0.0
        %1857 = vmatpush1.msra.mxu0 %v1812
        %1858 = vmatprep.subr.mxu0 0.0
        %1859 = vmatpush2.msra.mxu0 0.0
        %1860 = vmatprep.subr.mxu0 0.0
        %1861 = vmatpush2.msra.mxu0 0.0
        %1862 = vmatprep.subr.mxu0 0.0
        %1863 = vmatpush2.msra.mxu0 0.0
        %1864 = vmatprep.subr.mxu0 0.0
        %1865 = vmatpush2.msra.mxu0 0.0
        %1866 = vmatprep.subr.mxu0 0.0
        %1867 = vmatpush2.msra.mxu0 0.0
        %1868 = vmatprep.subr.mxu0 0.0
        %1869 = vmatpush2.msra.mxu0 0.0
        %1870 = vmatprep.subr.mxu0 0.0
        %1871 = vmatpush2.msra.mxu0 0.0
        %1872 = vmatprep.subr.mxu0 0.0
        %1873 = vmatpush2.msra.mxu0 0.0
        %1874 = vmatprep.subr.mxu0 0.0
        %1875 = vmatpush2.msra.mxu0 0.0
        %1876 = vmatprep.subr.mxu0 0.0
        %1877 = vmatpush2.msra.mxu0 0.0
        %1878 = vmatprep.subr.mxu0 0.0
        %1879 = vmatpush2.msra.mxu0 0.0
        %1880 = vmatprep.subr.mxu0 0.0
        %1881 = vmatpush2.msra.mxu0 0.0
        %1882 = vmatprep.subr.mxu0 0.0
        %1883 = vmatpush2.msra.mxu0 0.0
        %1884 = vmatprep.subr.mxu0 0.0
        %1885 = vmatpush2.msra.mxu0 0.0
        %1886 = vmatprep.subr.mxu0 0.0
        %1887 = vmatpush2.msra.mxu0 0.0
        %1888 = vmatprep.subr.mxu0 0.0
        %1889 = vmatpush2.msra.mxu0 0.0
        %1890 = vmatprep.mubr.f32.mxu0 0.0
        %1891 = vmatmul.mubr.f32.gmra.mxu0 %v1824
        %v1892 = vpop.f32.mrf.mxu0
        %v1893 = vadd.f32 %v1821, %v1892
        %v1894 = vpop.f32.mrf.mxu0
        %1895 = vdwg.mxu0
        %v1896 = vmul.f32 %v1893, 0.5
        %v1897 = vmul.f32 %v1893, 0.70710677
        %v1898 = verf.f32.pop %v1897
        %v1899 = vadd.f32 %v1898, 1.0
        %v1900 = vmul.f32 %v1896, %v1899
        %v1901 = vld [vmem:[%s15] sm:$0xff]
        %v1902 = vld [vmem:[%s15 + $0x8] sm:$0xff]
        %v1903 = vld [vmem:[%s15 + $0x10] sm:$0xff]
        %v1904 = vld [vmem:[%s15 + $0x18] sm:$0xff]
        %v1905 = vld [vmem:[%s15 + $0x20] sm:$0xff]
        %v1906 = vld [vmem:[%s15 + $0x28] sm:$0xff]
        %v1907 = vld [vmem:[%s15 + $0x30] sm:$0xff]
        %v1908 = vld [vmem:[%s15 + $0x38] sm:$0xff]
        %v1909 = vld [vmem:[%s15 + $0x40] sm:$0xff]
        %v1910 = vld [vmem:[%s15 + $0x48] sm:$0xff]
        %v1911 = vld [vmem:[%s15 + $0x50] sm:$0xff]
        %v1912 = vld [vmem:[%s15 + $0x58] sm:$0xff]
        %v1913 = vld [vmem:[%s15 + $0x60] sm:$0xff]
        %v1914 = vld [vmem:[%s15 + $0x68] sm:$0xff]
        %v1915 = vld [vmem:[%s15 + $0x70] sm:$0xff]
        %v1916 = vld [vmem:[%s15 + $0x78] sm:$0xff]
        %v1917 = vld [vmem:[%s16] sm:$0x1]
        %v1919 = vlaneseq
        %v1920 = vshrl.u32 %v1919, 7
        %v1921 = vsub.s32 0, %v1920
        %v1922 = vrot.slane %v1917, %v1921
        %1924 = vmatprep.subr.mxu0 0.0
        %1925 = vmatpush1.msra.mxu0 %v1916
        %1926 = vmatprep.subr.mxu0 0.0
        %1927 = vmatpush1.msra.mxu0 %v1915
        %1928 = vmatprep.subr.mxu0 0.0
        %1929 = vmatpush1.msra.mxu0 %v1914
        %1930 = vmatprep.subr.mxu0 0.0
        %1931 = vmatpush1.msra.mxu0 %v1913
        %1932 = vmatprep.subr.mxu0 0.0
        %1933 = vmatpush1.msra.mxu0 %v1912
        %1934 = vmatprep.subr.mxu0 0.0
        %1935 = vmatpush1.msra.mxu0 %v1911
        %1936 = vmatprep.subr.mxu0 0.0
        %1937 = vmatpush1.msra.mxu0 %v1910
        %1938 = vmatprep.subr.mxu0 0.0
        %1939 = vmatpush1.msra.mxu0 %v1909
        %1940 = vmatprep.subr.mxu0 0.0
        %1941 = vmatpush1.msra.mxu0 %v1908
        %1942 = vmatprep.subr.mxu0 0.0
        %1943 = vmatpush1.msra.mxu0 %v1907
        %1944 = vmatprep.subr.mxu0 0.0
        %1945 = vmatpush1.msra.mxu0 %v1906
        %1946 = vmatprep.subr.mxu0 0.0
        %1947 = vmatpush1.msra.mxu0 %v1905
        %1948 = vmatprep.subr.mxu0 0.0
        %1949 = vmatpush1.msra.mxu0 %v1904
        %1950 = vmatprep.subr.mxu0 0.0
        %1951 = vmatpush1.msra.mxu0 %v1903
        %1952 = vmatprep.subr.mxu0 0.0
        %1953 = vmatpush1.msra.mxu0 %v1902
        %1954 = vmatprep.subr.mxu0 0.0
        %1955 = vmatpush1.msra.mxu0 %v1901
        %1956 = vmatprep.subr.mxu0 0.0
        %1957 = vmatpush2.msra.mxu0 0.0
        %1958 = vmatprep.subr.mxu0 0.0
        %1959 = vmatpush2.msra.mxu0 0.0
        %1960 = vmatprep.subr.mxu0 0.0
        %1961 = vmatpush2.msra.mxu0 0.0
        %1962 = vmatprep.subr.mxu0 0.0
        %1963 = vmatpush2.msra.mxu0 0.0
        %1964 = vmatprep.subr.mxu0 0.0
        %1965 = vmatpush2.msra.mxu0 0.0
        %1966 = vmatprep.subr.mxu0 0.0
        %1967 = vmatpush2.msra.mxu0 0.0
        %1968 = vmatprep.subr.mxu0 0.0
        %1969 = vmatpush2.msra.mxu0 0.0
        %1970 = vmatprep.subr.mxu0 0.0
        %1971 = vmatpush2.msra.mxu0 0.0
        %1972 = vmatprep.subr.mxu0 0.0
        %1973 = vmatpush2.msra.mxu0 0.0
        %1974 = vmatprep.subr.mxu0 0.0
        %1975 = vmatpush2.msra.mxu0 0.0
        %1976 = vmatprep.subr.mxu0 0.0
        %1977 = vmatpush2.msra.mxu0 0.0
        %1978 = vmatprep.subr.mxu0 0.0
        %1979 = vmatpush2.msra.mxu0 0.0
        %1980 = vmatprep.subr.mxu0 0.0
        %1981 = vmatpush2.msra.mxu0 0.0
        %1982 = vmatprep.subr.mxu0 0.0
        %1983 = vmatpush2.msra.mxu0 0.0
        %1984 = vmatprep.subr.mxu0 0.0
        %1985 = vmatpush2.msra.mxu0 0.0
        %1986 = vmatprep.subr.mxu0 0.0
        %1987 = vmatpush2.msra.mxu0 0.0
        %1988 = vmatprep.mubr.f32.mxu0 0.0
        %1989 = vmatmul.mubr.f32.gmra.mxu0 %v1900
        %v1990 = vpop.f32.mrf.mxu0
        %v1991 = vadd.f32 %v1922, %v1990
        %v1992 = vpop.f32.mrf.mxu0
        %1993 = vdwg.mxu0
        %v1994 = vadd.f32 %v1811, %v1991
        %v1995 = vld [vmem:[%s17] sm:$0x1]
        %v1996 = vld [vmem:[%s18] sm:$0x1]
        %v1997 = vsel %vm735, %v1994, 0.0
        %1998 = vadd.xlane.f32.xlu0 %v1997
        %v1999 = vpop.xlane.xlu0 %1998
        %v2000 = vmul.f32 %v1999, %v1787
        %v2001 = vsub.f32 %v1994, %v2000
        %v2002 = vmul.f32 %v2001, %v2001
        %v2003 = vsel %vm735, %v2002, 0.0
        %2004 = vadd.xlane.f32.xlu0 %v2003
        %v2005 = vpop.xlane.xlu0 %2004
        %v2006 = vmul.f32 %v2005, %v1787
        %v2007 = vadd.f32 %v2006, 1e-05
        %v2008 = vrsqrt.pop %v2007
        %v2009 = vmul.f32 %v2001, %v2008
        %v2011 = vlaneseq
        %v2012 = vshrl.u32 %v2011, 7
        %v2013 = vsub.s32 0, %v2012
        %v2014 = vrot.slane %v1995, %v2013
        %v2016 = vmul.f32 %v2009, %v2014
        %v2018 = vlaneseq
        %v2019 = vshrl.u32 %v2018, 7
        %v2020 = vsub.s32 0, %v2019
        %v2021 = vrot.slane %v1996, %v2020
        %v2023 = vadd.f32 %v2016, %v2021
        %v2024 = vld [vmem:[%s709] sm:$0xff]
        %2026 = vset.pattern.permute.xlu0 0
        %2027 = vperm.xlu0 %2026, %v2024
        %v2028 = vpop.permute.xlu0 %2027
        %v2030 = vmul.f32 %v2023, %v2028
        %2031 = vst.msk [vmem:[%s680] sm:$0xff] %vm735, %v2030
        %s2032 = sand.u32 %s482, 1
        %s2033 = scalar_lea.sflag [#allocation3], %s2032
        %s2034 = sand.u32 %s482, 1
        %s2035 = smul.addr %s2034, 8
        %s2036 = scalar_lea.vmem [#allocation2], %s2035
        // Predicated region
        $region97: #{tpu_custom_call.1} parent=95 // pred_check
          %p2037 = pneg %p492
        $region98: #{tpu_custom_call.1} parent=95 // pred_check_branch
          %2039 = sbr.rel (%p2037) target = $region100
        $region99: #{tpu_custom_call.1} parent=95 // pred_region
          %s2041 = ssub.s32 128, 128
          %2042 = vsyncadd %s2033, %s2041
          %s2043 = sadd.s32 %s38, %s37
          %s2044 = smul.addr %s2043, 128
          %s2045 = scalar_lea.hbm %s19, %s2044
          %s2047 = sshll.u32 %s2036, 4
          %s2048 = int_to_ptr.vmem [resolvable:$true] %s2047
          %2050 = dma.vmem_to_hbm [thread:$0]  %s2048, 128, %s2045, %s2033
        $region100: #{tpu_custom_call.1} parent=95 // pred_fallthru
          _
      $region96: #{tpu_custom_call.1} parent=5 // pred_fallthru
        _
      %p2051 = scmp.le.s32.totalorder 2, %s28
      // Predicated region
      $region101: #{tpu_custom_call.1} parent=5 // pred_check
        %p2052 = pneg %p2051
      $region102: #{tpu_custom_call.1} parent=5 // pred_check_branch
        %2054 = sbr.rel (%p2052) target = $region104
      $region103: #{tpu_custom_call.1} parent=5 // pred_region
        %s2055 = ssub.s32 %s28, 2
        // Predicated region
        $region105: #{tpu_custom_call.1} parent=103 // pred_check
          %p2056 = pneg %p498
        $region106: #{tpu_custom_call.1} parent=103 // pred_check_branch
          %2058 = sbr.rel (%p2056) target = $region108
        $region107: #{tpu_custom_call.1} parent=103 // pred_region
          %s2059 = sand.u32 %s483, 1
          %s2060 = scalar_lea.sflag [#allocation3], %s2059
          %s2061 = sand.u32 %s483, 1
          %s2062 = smul.addr %s2061, 8
          %s2063 = scalar_lea.vmem [#allocation2], %s2062
          %2064 = dma.done %s2060, 128
        $region108: #{tpu_custom_call.1} parent=103 // pred_fallthru
          _
      $region104: #{tpu_custom_call.1} parent=5 // pred_fallthru
        _
    $region6: #{tpu_custom_call.1} parent=1 // loop_footer
      %s32 = sadd.s32 1, %s28
    $region7: #{tpu_custom_call.1} parent=1 // loop_footer_branch
      %27 = sbr.rel target = $region3
    $region8: #{tpu_custom_call.1} parent=1 // loop_exit
      _
    %2065 = vsyncpa [#allocation3], 1
    %s2066 = scalar_lea.sflag [#allocation3], 1
    %2067 = vsyncpa %s2066, 1

</llo_original>
